<compile_context>
chip_gen: v5e
topology: v5e:2x2
jax: 0.10.0
libtpu: 0.0.40
codegen_flags: <defaults>
</compile_context>

<pallas_src>
import functools
import math

import jax
import jax.numpy as jnp
from jax.experimental import pallas as pl
from jax.experimental.pallas import tpu as pltpu


def _simple_gcn_kernel(x_ref, w1_ref, b1_ref, w2_ref, b2_ref, a_ref, a2_ref,
                       out_ref, h_ref, acc_ref, *, tm, tk):
    t = pl.program_id(0)      # hop index (outermost, sequential)
    i = pl.program_id(1)      # node-row block of A1 / h_next
    kk = pl.program_id(2)     # reduction (column) block of A1 / h_cur (innermost)
    n_k = pl.num_programs(2)

    slot_r = t % 2            # h buffer read this hop
    slot_w = (t + 1) % 2      # h buffer written this hop

    # --- One-time MLP: h0 = relu(x @ W1 + b1) into read slot 0. ----------------
    # (x/W1 are bf16; accumulate in f32. Zero-padded rows/cols are harmless: the
    #  padded A1 columns are zero so padded h rows never reach real rows.)
    @pl.when((t == 0) & (i == 0) & (kk == 0))
    def _():
        h0 = jnp.dot(x_ref[...], w1_ref[...], preferred_element_type=jnp.float32)
        h_ref[0] = jnp.maximum(h0 + b1_ref[...], 0.0)

    # --- Blocked A1 @ h accumulation (bf16 operands, f32 accumulate on MXU). ----
    @pl.when(kk == 0)
    def _():
        acc_ref[...] = jnp.zeros_like(acc_ref)

    k_off = pl.multiple_of(kk * tk, tk)
    h_k = h_ref[slot_r, pl.ds(k_off, tk), :]
    acc_ref[...] += jnp.dot(a_ref[...], h_k.astype(jnp.bfloat16),
                            preferred_element_type=jnp.float32)

    # --- Finalize row block: add A2 * h, store next h, project through layer2. -
    @pl.when(kk == n_k - 1)
    def _():
        r_off = pl.multiple_of(i * tm, tm)
        h_i = h_ref[slot_r, pl.ds(r_off, tm), :]
        h_new = acc_ref[...] + a2_ref[...] * h_i          # f32 elementwise term
        h_ref[slot_w, pl.ds(r_off, tm), :] = h_new
        # Write layer2 of the current hop's h every time so out_ref always holds
        # valid data (only the last hop's writeback survives); the extra
        # (tm x Hp x Op) matmul is negligible next to the A1 @ h work.
        out_ref[...] = (jnp.dot(h_new.astype(jnp.bfloat16), w2_ref[...],
                                preferred_element_type=jnp.float32)
                        + b2_ref[...])


def _round_up(v, m):
    return ((v + m - 1) // m) * m


def simple_gcn_forward(x, w1, b1, w2, b2, A1, A2, *, hop=10, tm=128, tk=128):
    """SimpleGCN forward (eval mode).

    x: [N, n_in] f32; w1: [n_in, n_hid]; b1: [1, n_hid]; w2: [n_hid, n_out];
    b2: [1, n_out]; A1: [N, N] normalized adjacency; A2: [N, 1] per-node
    elementwise weight. Returns [N, n_out] f32.
    """
    assert hop >= 1
    N, n_in = x.shape
    n_hid = w1.shape[1]
    n_out = w2.shape[1]

    N_p = _round_up(N, math.lcm(tm, tk))
    Fp = _round_up(n_in, 128)
    Hp = _round_up(n_hid, 128)
    Op = _round_up(n_out, 128)

    def pad2(a, r, c):
        return jnp.pad(a, ((0, r - a.shape[0]), (0, c - a.shape[1])))

    x_p = pad2(x, N_p, Fp).astype(jnp.bfloat16)
    w1_p = pad2(w1, Fp, Hp).astype(jnp.bfloat16)
    b1_p = pad2(b1, 1, Hp)
    w2_p = pad2(w2, Hp, Op).astype(jnp.bfloat16)
    b2_p = pad2(b2, 1, Op)
    a_p = pad2(A1, N_p, N_p).astype(jnp.bfloat16)
    a2_p = pad2(A2, N_p, 1)

    grid = (hop, N_p // tm, N_p // tk)
    kernel = functools.partial(_simple_gcn_kernel, tm=tm, tk=tk)

    out_p = pl.pallas_call(
        kernel,
        out_shape=jax.ShapeDtypeStruct((N_p, Op), jnp.float32),
        grid_spec=pltpu.PrefetchScalarGridSpec(
            num_scalar_prefetch=0,
            grid=grid,
            in_specs=[
                pl.BlockSpec((N_p, Fp), lambda t, i, k: (0, 0)),   # x (VMEM-resident)
                pl.BlockSpec((Fp, Hp), lambda t, i, k: (0, 0)),    # W1
                pl.BlockSpec((1, Hp), lambda t, i, k: (0, 0)),     # b1
                pl.BlockSpec((Hp, Op), lambda t, i, k: (0, 0)),    # W2
                pl.BlockSpec((1, Op), lambda t, i, k: (0, 0)),     # b2
                pl.BlockSpec((tm, tk), lambda t, i, k: (i, k)),    # A1 tiles (streamed)
                pl.BlockSpec((tm, 1), lambda t, i, k: (i, 0)),     # A2 row block
            ],
            out_specs=pl.BlockSpec((tm, Op), lambda t, i, k: (i, 0)),
            scratch_shapes=[
                pltpu.VMEM((2, N_p, Hp), jnp.float32),   # double-buffered h (f32)
                pltpu.VMEM((tm, Hp), jnp.float32),       # A1 @ h accumulator
            ],
        ),
        compiler_params=pltpu.CompilerParams(
            # hop axis is sequential and the row axis shares the h scratch, so
            # keep everything "arbitrary" (megacore sharding would be unsafe).
            dimension_semantics=("arbitrary", "arbitrary", "arbitrary"),
            # Explicit, conservative budget that fits v5e/v6e/v7x physical VMEM.
            vmem_limit_bytes=48 * 1024 * 1024,
        ),
    )(x_p, w1_p, b1_p, w2_p, b2_p, a_p, a2_p)

    return out_p[:N, :n_out]


def _xavier_uniform(key, shape_in_out, gain):
    fan_in, fan_out = shape_in_out
    limit = gain * jnp.sqrt(6.0 / (fan_in + fan_out))
    return jax.random.uniform(key, shape_in_out, jnp.float32, -limit, limit)


if __name__ == "__main__":
    # Small shapes consistent with the module: N nodes, n_in -> n_hid -> n_out.
    N, n_in, n_hid, n_out, hop = 256, 64, 32, 16, 10

    key = jax.random.PRNGKey(0)
    kx, ka, kw1, kb1, kw2, kb2 = jax.random.split(key, 6)

    # Node features.
    x = jax.random.normal(kx, (N, n_in), jnp.float32)

    # Dense stand-in for the sparse normalized adjacency A1 (row-normalized with
    # self loops) and the per-node elementwise term A2 (broadcast over features).
    logits = jax.random.uniform(ka, (N, N), jnp.float32)
    adj = (logits > 0.95).astype(jnp.float32)
    adj = jnp.maximum(adj, adj.T) + jnp.eye(N, dtype=jnp.float32)
    deg = jnp.sum(adj, axis=1, keepdims=True)
    A1 = adj / deg                      # D^-1 (A + I)
    A2 = 1.0 / deg                      # [N, 1]

    # Parameters: xavier_uniform weights (as in reset_param), PyTorch-default
    # uniform biases; stored transposed as [in, out] for `x @ W`.
    relu_gain = jnp.sqrt(2.0)           # nn.init.calculate_gain('relu')
    w1 = _xavier_uniform(kw1, (n_in, n_hid), relu_gain)
    w2 = _xavier_uniform(kw2, (n_hid, n_out), 1.414)
    b1 = jax.random.uniform(kb1, (1, n_hid), jnp.float32,
                            -1.0 / jnp.sqrt(n_in * 1.0), 1.0 / jnp.sqrt(n_in * 1.0))
    b2 = jax.random.uniform(kb2, (1, n_out), jnp.float32,
                            -1.0 / jnp.sqrt(n_hid * 1.0), 1.0 / jnp.sqrt(n_hid * 1.0))

    out = simple_gcn_forward(x, w1, b1, w2, b2, A1, A2, hop=hop)
    out = jax.block_until_ready(out)

    # Pure-JAX reference (eval-mode dropout) with the same bf16 operand handling.
    f32 = jnp.float32
    bf = lambda a: a.astype(jnp.bfloat16).astype(f32)
    hi = jax.lax.Precision.HIGHEST
    h_ref = jnp.maximum(jnp.dot(bf(x), bf(w1), precision=hi) + b1, 0.0)
    for _ in range(hop):
        h_ref = jnp.dot(bf(A1), bf(h_ref), precision=hi) + A2 * h_ref
    o_ref = jnp.dot(bf(h_ref), bf(w2), precision=hi) + b2

    assert out.shape == (N, n_out)
    err = float(jnp.max(jnp.abs(out - o_ref)))
    assert jnp.allclose(out, o_ref, atol=1e-3, rtol=1e-3), f"max abs err {err}"

    print("KERNEL_OK")
</pallas_src>

<mosaic_0001>
module attributes {stable_mosaic.version = 11 : i64} {
  func.func @_simple_gcn_kernel(%arg0: i32, %arg1: i32, %arg2: i32, %arg3: memref<256x128xbf16, #tpu.memory_space<vmem>>, %arg4: memref<128x128xbf16, #tpu.memory_space<vmem>>, %arg5: memref<1x128xf32, #tpu.memory_space<vmem>>, %arg6: memref<128x128xbf16, #tpu.memory_space<vmem>>, %arg7: memref<1x128xf32, #tpu.memory_space<vmem>>, %arg8: memref<128x128xbf16, #tpu.memory_space<vmem>>, %arg9: memref<128x1xf32, #tpu.memory_space<vmem>>, %arg10: memref<128x128xf32, #tpu.memory_space<vmem>>, %arg11: memref<2x256x128xf32, #tpu.memory_space<vmem>>, %arg12: memref<128x128xf32, #tpu.memory_space<vmem>>) attributes {dimension_semantics = [#tpu.dimension_semantics<arbitrary>, #tpu.dimension_semantics<arbitrary>, #tpu.dimension_semantics<arbitrary>], iteration_bounds = array<i64: 10, 2, 2>, scalar_prefetch = 0 : i64, scratch_operands = 2 : i64, tpu.core_type = #tpu.core_type<tc>, window_params = [{pipeline_mode = #tpu.pipeline_mode<synchronous>, transform_indices = @transform_0, window_bounds = array<i64: 256, 128>}, {pipeline_mode = #tpu.pipeline_mode<synchronous>, transform_indices = @transform_1, window_bounds = array<i64: 128, 128>}, {pipeline_mode = #tpu.pipeline_mode<synchronous>, transform_indices = @transform_2, window_bounds = array<i64: 1, 128>}, {pipeline_mode = #tpu.pipeline_mode<synchronous>, transform_indices = @transform_3, window_bounds = array<i64: 128, 128>}, {pipeline_mode = #tpu.pipeline_mode<synchronous>, transform_indices = @transform_4, window_bounds = array<i64: 1, 128>}, {transform_indices = @transform_5, window_bounds = array<i64: 128, 128>}, {transform_indices = @transform_6, window_bounds = array<i64: 128, 1>}, {transform_indices = @transform_7, window_bounds = array<i64: 128, 128>}]} {
    %c2_i32 = arith.constant 2 : i32
    %c0_i32 = arith.constant 0 : i32
    %0 = arith.cmpi eq, %c2_i32, %c0_i32 : i32
    %c1_i32 = arith.constant 1 : i32
    %1 = arith.select %0, %c1_i32, %c2_i32 : i32
    %2 = arith.remsi %arg0, %1 : i32
    %c0_i32_0 = arith.constant 0 : i32
    %3 = arith.cmpi ne, %2, %c0_i32_0 : i32
    %c0_i32_1 = arith.constant 0 : i32
    %4 = arith.cmpi slt, %2, %c0_i32_1 : i32
    %c0_i32_2 = arith.constant 0 : i32
    %5 = arith.cmpi slt, %1, %c0_i32_2 : i32
    %6 = arith.xori %4, %5 : i1
    %7 = arith.andi %6, %3 : i1
    %8 = arith.addi %2, %1 : i32
    %9 = arith.select %7, %8, %2 : i32
    %c1_i32_3 = arith.constant 1 : i32
    %10 = arith.addi %arg0, %c1_i32_3 : i32
    %c2_i32_4 = arith.constant 2 : i32
    %c0_i32_5 = arith.constant 0 : i32
    %11 = arith.cmpi eq, %c2_i32_4, %c0_i32_5 : i32
    %c1_i32_6 = arith.constant 1 : i32
    %12 = arith.select %11, %c1_i32_6, %c2_i32_4 : i32
    %13 = arith.remsi %10, %12 : i32
    %c0_i32_7 = arith.constant 0 : i32
    %14 = arith.cmpi ne, %13, %c0_i32_7 : i32
    %c0_i32_8 = arith.constant 0 : i32
    %15 = arith.cmpi slt, %13, %c0_i32_8 : i32
    %c0_i32_9 = arith.constant 0 : i32
    %16 = arith.cmpi slt, %12, %c0_i32_9 : i32
    %17 = arith.xori %15, %16 : i1
    %18 = arith.andi %17, %14 : i1
    %19 = arith.addi %13, %12 : i32
    %20 = arith.select %18, %19, %13 : i32
    %c0_i32_10 = arith.constant 0 : i32
    %21 = arith.cmpi eq, %arg0, %c0_i32_10 : i32
    %c0_i32_11 = arith.constant 0 : i32
    %22 = arith.cmpi eq, %arg1, %c0_i32_11 : i32
    %23 = arith.andi %21, %22 : i1
    %c0_i32_12 = arith.constant 0 : i32
    %24 = arith.cmpi eq, %arg2, %c0_i32_12 : i32
    %25 = arith.andi %23, %24 : i1
    %26 = arith.extui %25 : i1 to i32
    %c0_i32_13 = arith.constant 0 : i32
    %27 = arith.cmpi ne, %26, %c0_i32_13 : i32
    scf.if %27 {
      %c0_24 = arith.constant 0 : index
      %c0_25 = arith.constant 0 : index
      %46 = vector.load %arg3[%c0_24, %c0_25] : memref<256x128xbf16, #tpu.memory_space<vmem>>, vector<256x128xbf16>
      %c0_26 = arith.constant 0 : index
      %c0_27 = arith.constant 0 : index
      %47 = vector.load %arg4[%c0_26, %c0_27] : memref<128x128xbf16, #tpu.memory_space<vmem>>, vector<128x128xbf16>
      %cst_28 = arith.constant dense<0.000000e+00> : vector<256x128xf32>
      %48 = tpu.matmul %46, %47, %cst_28 {dimension_numbers = #tpu.dot_dimension_numbers<[1], [0], [0], [1], [0, 0, 1, 1], [], []>} : vector<256x128xbf16>, vector<128x128xbf16>, vector<256x128xf32> -> vector<256x128xf32>
      %c0_29 = arith.constant 0 : index
      %c0_30 = arith.constant 0 : index
      %49 = vector.load %arg5[%c0_29, %c0_30] : memref<1x128xf32, #tpu.memory_space<vmem>>, vector<1x128xf32>
      %50 = vector.broadcast %49 : vector<1x128xf32> to vector<256x128xf32>
      %51 = arith.addf %48, %50 : vector<256x128xf32>
      %cst_31 = arith.constant 0.000000e+00 : f32
      %52 = vector.broadcast %cst_31 : f32 to vector<256x128xf32>
      %53 = arith.maximumf %51, %52 : vector<256x128xf32>
      %c0_32 = arith.constant 0 : index
      %c0_33 = arith.constant 0 : index
      %c0_34 = arith.constant 0 : index
      %54 = vector.load %arg11[%c0_32, %c0_33, %c0_34] : memref<2x256x128xf32, #tpu.memory_space<vmem>>, vector<1x256x128xf32>
      %55 = vector.shape_cast %54 : vector<1x256x128xf32> to vector<256x128xf32>
      %56 = vector.shape_cast %53 : vector<256x128xf32> to vector<1x256x128xf32>
      tpu.vector_store %arg11[%c0_32, %c0_33, %c0_34], %56 {strides = array<i32>} : memref<2x256x128xf32, #tpu.memory_space<vmem>>, vector<1x256x128xf32>,
    } else {
    }
    %c0_i32_14 = arith.constant 0 : i32
    %28 = arith.cmpi eq, %arg2, %c0_i32_14 : i32
    %29 = arith.extui %28 : i1 to i32
    %c0_i32_15 = arith.constant 0 : i32
    %30 = arith.cmpi ne, %29, %c0_i32_15 : i32
    scf.if %30 {
      %cst_24 = arith.constant 0.000000e+00 : f32
      %46 = vector.broadcast %cst_24 : f32 to vector<128x128xf32>
      %c0_25 = arith.constant 0 : index
      %c0_26 = arith.constant 0 : index
      %47 = vector.load %arg12[%c0_25, %c0_26] : memref<128x128xf32, #tpu.memory_space<vmem>>, vector<128x128xf32>
      tpu.vector_store %arg12[%c0_25, %c0_26], %46 {strides = array<i32>} : memref<128x128xf32, #tpu.memory_space<vmem>>, vector<128x128xf32>,
    } else {
    }
    %c128_i32 = arith.constant 128 : i32
    %31 = arith.muli %arg2, %c128_i32 : i32
    %32 = tpu.assume_multiple %31, 128 : i32
    %33 = arith.index_cast %9 : i32 to index
    %34 = arith.index_cast %32 : i32 to index
    %c0 = arith.constant 0 : index
    %35 = vector.load %arg11[%33, %34, %c0] : memref<2x256x128xf32, #tpu.memory_space<vmem>>, vector<1x128x128xf32>
    %36 = vector.shape_cast %35 : vector<1x128x128xf32> to vector<128x128xf32>
    %c0_16 = arith.constant 0 : index
    %c0_17 = arith.constant 0 : index
    %37 = vector.load %arg12[%c0_16, %c0_17] : memref<128x128xf32, #tpu.memory_space<vmem>>, vector<128x128xf32>
    %c0_18 = arith.constant 0 : index
    %c0_19 = arith.constant 0 : index
    %38 = vector.load %arg8[%c0_18, %c0_19] : memref<128x128xbf16, #tpu.memory_space<vmem>>, vector<128x128xbf16>
    %39 = arith.truncf %36 : vector<128x128xf32> to vector<128x128xbf16>
    %cst = arith.constant dense<0.000000e+00> : vector<128x128xf32>
    %40 = tpu.matmul %38, %39, %cst {dimension_numbers = #tpu.dot_dimension_numbers<[1], [0], [0], [1], [0, 0, 1, 1], [], []>} : vector<128x128xbf16>, vector<128x128xbf16>, vector<128x128xf32> -> vector<128x128xf32>
    %41 = arith.addf %37, %40 : vector<128x128xf32>
    %c0_20 = arith.constant 0 : index
    %c0_21 = arith.constant 0 : index
    %42 = vector.load %arg12[%c0_20, %c0_21] : memref<128x128xf32, #tpu.memory_space<vmem>>, vector<128x128xf32>
    tpu.vector_store %arg12[%c0_20, %c0_21], %41 {strides = array<i32>} : memref<128x128xf32, #tpu.memory_space<vmem>>, vector<128x128xf32>,
    %c1_i32_22 = arith.constant 1 : i32
    %43 = arith.cmpi eq, %arg2, %c1_i32_22 : i32
    %44 = arith.extui %43 : i1 to i32
    %c0_i32_23 = arith.constant 0 : i32
    %45 = arith.cmpi ne, %44, %c0_i32_23 : i32
    scf.if %45 {
      %c128_i32_24 = arith.constant 128 : i32
      %46 = arith.muli %arg1, %c128_i32_24 : i32
      %47 = tpu.assume_multiple %46, 128 : i32
      %48 = arith.index_cast %9 : i32 to index
      %49 = arith.index_cast %47 : i32 to index
      %c0_25 = arith.constant 0 : index
      %50 = vector.load %arg11[%48, %49, %c0_25] : memref<2x256x128xf32, #tpu.memory_space<vmem>>, vector<1x128x128xf32>
      %51 = vector.shape_cast %50 : vector<1x128x128xf32> to vector<128x128xf32>
      %c0_26 = arith.constant 0 : index
      %c0_27 = arith.constant 0 : index
      %52 = vector.load %arg12[%c0_26, %c0_27] : memref<128x128xf32, #tpu.memory_space<vmem>>, vector<128x128xf32>
      %c0_28 = arith.constant 0 : index
      %c0_29 = arith.constant 0 : index
      %53 = vector.load %arg9[%c0_28, %c0_29] : memref<128x1xf32, #tpu.memory_space<vmem>>, vector<128x1xf32>
      %54 = vector.broadcast %53 : vector<128x1xf32> to vector<128x128xf32>
      %55 = arith.mulf %54, %51 : vector<128x128xf32>
      %56 = arith.addf %52, %55 : vector<128x128xf32>
      %57 = arith.index_cast %20 : i32 to index
      %58 = arith.index_cast %47 : i32 to index
      %c0_30 = arith.constant 0 : index
      %59 = vector.load %arg11[%57, %58, %c0_30] : memref<2x256x128xf32, #tpu.memory_space<vmem>>, vector<1x128x128xf32>
      %60 = vector.shape_cast %59 : vector<1x128x128xf32> to vector<128x128xf32>
      %61 = vector.shape_cast %56 : vector<128x128xf32> to vector<1x128x128xf32>
      tpu.vector_store %arg11[%57, %58, %c0_30], %61 {strides = array<i32>} : memref<2x256x128xf32, #tpu.memory_space<vmem>>, vector<1x128x128xf32>,
      %62 = arith.truncf %56 : vector<128x128xf32> to vector<128x128xbf16>
      %c0_31 = arith.constant 0 : index
      %c0_32 = arith.constant 0 : index
      %63 = vector.load %arg6[%c0_31, %c0_32] : memref<128x128xbf16, #tpu.memory_space<vmem>>, vector<128x128xbf16>
      %cst_33 = arith.constant dense<0.000000e+00> : vector<128x128xf32>
      %64 = tpu.matmul %62, %63, %cst_33 {dimension_numbers = #tpu.dot_dimension_numbers<[1], [0], [0], [1], [0, 0, 1, 1], [], []>} : vector<128x128xbf16>, vector<128x128xbf16>, vector<128x128xf32> -> vector<128x128xf32>
      %c0_34 = arith.constant 0 : index
      %c0_35 = arith.constant 0 : index
      %65 = vector.load %arg7[%c0_34, %c0_35] : memref<1x128xf32, #tpu.memory_space<vmem>>, vector<1x128xf32>
      %66 = vector.broadcast %65 : vector<1x128xf32> to vector<128x128xf32>
      %67 = arith.addf %64, %66 : vector<128x128xf32>
      %c0_36 = arith.constant 0 : index
      %c0_37 = arith.constant 0 : index
      %68 = vector.load %arg10[%c0_36, %c0_37] : memref<128x128xf32, #tpu.memory_space<vmem>>, vector<128x128xf32>
      tpu.vector_store %arg10[%c0_36, %c0_37], %67 {strides = array<i32>} : memref<128x128xf32, #tpu.memory_space<vmem>>, vector<128x128xf32>,
    } else {
    }
    return
  }
  func.func @transform_0(%arg0: i32, %arg1: i32, %arg2: i32) -> (i32, i32) {
    %c0_i32 = arith.constant 0 : i32
    %c0_i32_0 = arith.constant 0 : i32
    %c0_i32_1 = arith.constant 0 : i32
    return %c0_i32, %c0_i32_0 : i32, i32
  }
  func.func @transform_1(%arg0: i32, %arg1: i32, %arg2: i32) -> (i32, i32) {
    %c0_i32 = arith.constant 0 : i32
    %c0_i32_0 = arith.constant 0 : i32
    %c0_i32_1 = arith.constant 0 : i32
    return %c0_i32, %c0_i32_0 : i32, i32
  }
  func.func @transform_2(%arg0: i32, %arg1: i32, %arg2: i32) -> (i32, i32) {
    %c0_i32 = arith.constant 0 : i32
    %c0_i32_0 = arith.constant 0 : i32
    %c0_i32_1 = arith.constant 0 : i32
    return %c0_i32, %c0_i32_0 : i32, i32
  }
  func.func @transform_3(%arg0: i32, %arg1: i32, %arg2: i32) -> (i32, i32) {
    %c0_i32 = arith.constant 0 : i32
    %c0_i32_0 = arith.constant 0 : i32
    %c0_i32_1 = arith.constant 0 : i32
    return %c0_i32, %c0_i32_0 : i32, i32
  }
  func.func @transform_4(%arg0: i32, %arg1: i32, %arg2: i32) -> (i32, i32) {
    %c0_i32 = arith.constant 0 : i32
    %c0_i32_0 = arith.constant 0 : i32
    %c0_i32_1 = arith.constant 0 : i32
    return %c0_i32, %c0_i32_0 : i32, i32
  }
  func.func @transform_5(%arg0: i32, %arg1: i32, %arg2: i32) -> (i32, i32) {
    %c0_i32 = arith.constant 0 : i32
    return %arg1, %arg2 : i32, i32
  }
  func.func @transform_6(%arg0: i32, %arg1: i32, %arg2: i32) -> (i32, i32) {
    %c0_i32 = arith.constant 0 : i32
    %c0_i32_0 = arith.constant 0 : i32
    return %arg1, %c0_i32 : i32, i32
  }
  func.func @transform_7(%arg0: i32, %arg1: i32, %arg2: i32) -> (i32, i32) {
    %c0_i32 = arith.constant 0 : i32
    %c0_i32_0 = arith.constant 0 : i32
    return %arg1, %c0_i32 : i32, i32
  }
}

</mosaic_0001>

<llo_original>
// kernel: tpu_custom_call.1
$region0: #{tpu_custom_call.1}
  #allocation0 [shape = 'u32[]', space=smem, size = 0x4, offset = 0x4, fixed_abs, tag = 'smem constant byte address 0x4 - core index']
  #allocation1 [shape = 'u32[72,128]{1,0:T(1,128)}', space=vmem, size = 0x9000, scoped, tag = 'internal scratch']
  #allocation2 [shape = 'f32[2,256,128]{2,1,0:T(8,128)}', space=vmem, size = 0x40000, scoped, tag = 'scratch operand']
  #allocation3 [shape = 'f32[128,128]{1,0:T(8,128)}', space=vmem, size = 0x10000, scoped, tag = 'scratch operand']
  %s0 = inlined_call_operand.hbm [shape: bf16[256,128], index: 0, kind: input, shape index: {}]
  %s1 = inlined_call_operand.hbm [shape: bf16[128,128], index: 1, kind: input, shape index: {}]
  %s2 = inlined_call_operand.vmem [shape: f32[1,128], index: 2, kind: input, shape index: {}]
  %s3 = inlined_call_operand.hbm [shape: bf16[128,128], index: 3, kind: input, shape index: {}]
  %s4 = inlined_call_operand.vmem [shape: f32[1,128], index: 4, kind: input, shape index: {}]
  %s5 = inlined_call_operand.vmem [shape: bf16[256,256], index: 5, kind: input, shape index: {}]
  %s6 = inlined_call_operand.vmem [shape: f32[256,1], index: 6, kind: input, shape index: {}]
  %s7 = inlined_call_operand.hbm [shape: f32[256,128], index: 7, kind: output, shape index: {}]
  %s8 = sld [smem:[#allocation0]]
  $region126: #{tpu_custom_call.1} parent=0
    _
  %s10 = ssub.s32 1, %s8
  %s11 = scalar_select 0, %s10, %s8
  $region1: #{tpu_custom_call.1} parent=0
    #allocation4 [shape = 'u8[65536]{0}', space=vmem, size = 0x10000, scoped, tag = 'input window, operand 0, single buffered']
    #allocation5 [shape = 's32[2]{0}', space=sflag, size = 0x8, scoped, tag = 'scoped memory for tpu_custom_call.1']
    #allocation6 [shape = 's32[2]{0}', space=sflag, size = 0x8, scoped, tag = 'scoped memory for tpu_custom_call.1']
    #allocation7 [shape = 'u8[32768]{0}', space=vmem, size = 0x8000, scoped, tag = 'input window, operand 1, single buffered']
    #allocation8 [shape = 's32[1]{0}', space=sflag, size = 0x4, scoped, tag = 'scoped memory for tpu_custom_call.1']
    #allocation9 [shape = 'u8[32768]{0}', space=vmem, size = 0x8000, scoped, tag = 'input window, operand 3, single buffered']
    #allocation10 [shape = 'u8[65536]{0}', space=vmem, size = 0x10000, scoped, tag = 'input window, operand 5']
    #allocation11 [shape = 'u8[131072]{0}', space=vmem, size = 0x20000, scoped, tag = 'output window, operand 0']
    %12 = vsyncpa [#allocation5], 0
    %13 = vsyncpa [#allocation8], 0
    %14 = vsyncpa [#allocation6], 0
    %s15 = scalar_lea.sflag [#allocation6], 1
    %16 = vsyncpa %s15, 0
    loop: start=0, step=1, limit=42
    $region2: #{tpu_custom_call.1} parent=1 // loop_pre_header
      _
    $region3: #{tpu_custom_call.1} parent=1 // loop_header
      %s18 = sphi 0, %s22
      %p19 = scmp.ge.s32.totalorder %s18, 42
      %s25 = sphi 0, %s44
      %s26 = sphi 0, %s40
      %s27 = sphi 0, %s36
      %s28 = sphi 0, %s25
      %s29 = sphi 0, %s26
      %s30 = sphi 0, %s27
      %s31 = sphi 0, %s28
      %s32 = sphi 0, %s29
      %s33 = sphi 0, %s30
      %s45 = sphi 0, %s45
      %s47 = sphi 0, %s45
      %s48 = sphi 0, %s47
      %s62 = sphi 0, %s48
      %s66 = sphi 0, %s66
      %s68 = sphi 0, %s66
      %s69 = sphi 0, %s68
      %s83 = sphi 0, %s69
      %s87 = sphi 0, %s87
      %s89 = sphi 0, %s87
      %s90 = sphi 0, %s89
      %s104 = sphi 0, %s90
      %s108 = sphi 0, %s108
      %s110 = sphi 0, %s108
      %s111 = sphi 0, %s110
      %s125 = sphi 0, %s111
      %s129 = sphi 0, %s129
      %s131 = sphi 0, %s129
      %s132 = sphi 0, %s131
      %s146 = sphi 0, %s132
      %s154 = sphi 0, %s156
      %s157 = sphi 0, %s154
      %s158 = sphi 0, %s157
      %s174 = sphi 0, %s158
      %s180 = sphi 0, %s182
      %s183 = sphi 0, %s180
      %s184 = sphi 0, %s183
      %s200 = sphi 0, %s184
      %s206 = sphi 0, %s208
      %s209 = sphi 0, %s206
      %s210 = sphi 0, %s209
      %s226 = sphi 0, %s210
    $region4: #{tpu_custom_call.1} parent=1 // loop_header_branch
      %21 = sbr.rel (%p19) target = $region8
    $region5: #{tpu_custom_call.1} parent=1 // loop_body
      %s23 = ssub.s32 %s18, 1
      %s24 = ssub.s32 %s18, 2
      %s34 = sadd.s32 1, %s27
      %p35 = scmp.ge.s32.totalorder %s34, 2
      %s36 = scalar_select %p35, 0, %s34
      %s37 = sadd.s32 1, %s26
      %s38 = scalar_select %p35, %s37, %s26
      %p39 = scmp.ge.s32.totalorder %s38, 2
      %s40 = scalar_select %p39, 0, %s38
      %s41 = sadd.s32 1, %s25
      %s42 = scalar_select %p39, %s41, %s25
      %p43 = scmp.ge.s32.totalorder %s42, 10
      %s44 = scalar_select %p43, 0, %s42
      %s46 = sadd.s32 %s45, 1
      %p49 = scmp.eq.s32.totalorder %s18, 39
      %p50 = scmp.ne.s32.totalorder %s45, %s47
      %p51 = scmp.eq.s32.totalorder %s18, 0
      %p52 = por %p50, %p51
      %p53 = scmp.ne.s32.totalorder %s45, %s47
      %p54 = scmp.eq.s32.totalorder %s23, 39
      %p55 = por %p53, %p54
      %p56 = scmp.ne.s32.totalorder %s47, %s48
      %p57 = scmp.eq.s32.totalorder %s23, 0
      %p58 = por %p56, %p57
      %p59 = scmp.ne.s32.totalorder %s47, %s48
      %p60 = scmp.eq.s32.totalorder %s24, 39
      %p61 = por %p59, %p60
      %p63 = scmp.ne.s32.totalorder %s48, %s62
      %p64 = scmp.eq.s32.totalorder %s24, 0
      %p65 = por %p63, %p64
      %s67 = sadd.s32 %s66, 1
      %p70 = scmp.eq.s32.totalorder %s18, 39
      %p71 = scmp.ne.s32.totalorder %s66, %s68
      %p72 = scmp.eq.s32.totalorder %s18, 0
      %p73 = por %p71, %p72
      %p74 = scmp.ne.s32.totalorder %s66, %s68
      %p75 = scmp.eq.s32.totalorder %s23, 39
      %p76 = por %p74, %p75
      %p77 = scmp.ne.s32.totalorder %s68, %s69
      %p78 = scmp.eq.s32.totalorder %s23, 0
      %p79 = por %p77, %p78
      %p80 = scmp.ne.s32.totalorder %s68, %s69
      %p81 = scmp.eq.s32.totalorder %s24, 39
      %p82 = por %p80, %p81
      %p84 = scmp.ne.s32.totalorder %s69, %s83
      %p85 = scmp.eq.s32.totalorder %s24, 0
      %p86 = por %p84, %p85
      %s88 = sadd.s32 %s87, 1
      %p91 = scmp.eq.s32.totalorder %s18, 39
      %p92 = scmp.ne.s32.totalorder %s87, %s89
      %p93 = scmp.eq.s32.totalorder %s18, 0
      %p94 = por %p92, %p93
      %p95 = scmp.ne.s32.totalorder %s87, %s89
      %p96 = scmp.eq.s32.totalorder %s23, 39
      %p97 = por %p95, %p96
      %p98 = scmp.ne.s32.totalorder %s89, %s90
      %p99 = scmp.eq.s32.totalorder %s23, 0
      %p100 = por %p98, %p99
      %p101 = scmp.ne.s32.totalorder %s89, %s90
      %p102 = scmp.eq.s32.totalorder %s24, 39
      %p103 = por %p101, %p102
      %p105 = scmp.ne.s32.totalorder %s90, %s104
      %p106 = scmp.eq.s32.totalorder %s24, 0
      %p107 = por %p105, %p106
      %s109 = sadd.s32 %s108, 1
      %p112 = scmp.eq.s32.totalorder %s18, 39
      %p113 = scmp.ne.s32.totalorder %s108, %s110
      %p114 = scmp.eq.s32.totalorder %s18, 0
      %p115 = por %p113, %p114
      %p116 = scmp.ne.s32.totalorder %s108, %s110
      %p117 = scmp.eq.s32.totalorder %s23, 39
      %p118 = por %p116, %p117
      %p119 = scmp.ne.s32.totalorder %s110, %s111
      %p120 = scmp.eq.s32.totalorder %s23, 0
      %p121 = por %p119, %p120
      %p122 = scmp.ne.s32.totalorder %s110, %s111
      %p123 = scmp.eq.s32.totalorder %s24, 39
      %p124 = por %p122, %p123
      %p126 = scmp.ne.s32.totalorder %s111, %s125
      %p127 = scmp.eq.s32.totalorder %s24, 0
      %p128 = por %p126, %p127
      %s130 = sadd.s32 %s129, 1
      %p133 = scmp.eq.s32.totalorder %s18, 39
      %p134 = scmp.ne.s32.totalorder %s129, %s131
      %p135 = scmp.eq.s32.totalorder %s18, 0
      %p136 = por %p134, %p135
      %p137 = scmp.ne.s32.totalorder %s129, %s131
      %p138 = scmp.eq.s32.totalorder %s23, 39
      %p139 = por %p137, %p138
      %p140 = scmp.ne.s32.totalorder %s131, %s132
      %p141 = scmp.eq.s32.totalorder %s23, 0
      %p142 = por %p140, %p141
      %p143 = scmp.ne.s32.totalorder %s131, %s132
      %p144 = scmp.eq.s32.totalorder %s24, 39
      %p145 = por %p143, %p144
      %p147 = scmp.ne.s32.totalorder %s132, %s146
      %p148 = scmp.eq.s32.totalorder %s24, 0
      %p149 = por %p147, %p148
      %s150 = ssub.s32 %s26, %s40
      %s151 = ssub.s32 %s27, %s36
      %s152 = sor.u32 %s150, %s151
      %p153 = scmp.eq.s32.totalorder %s152, 0
      %s155 = sadd.s32 %s154, 1
      %s156 = scalar_select %p153, %s154, %s155
      %p159 = pneg %p153
      %p160 = scmp.eq.s32.totalorder %s18, 39
      %p161 = por %p159, %p160
      %p162 = scmp.ne.s32.totalorder %s154, %s157
      %p163 = scmp.eq.s32.totalorder %s18, 0
      %p164 = por %p162, %p163
      %p165 = scmp.ne.s32.totalorder %s154, %s157
      %p166 = scmp.eq.s32.totalorder %s23, 39
      %p167 = por %p165, %p166
      %p168 = scmp.ne.s32.totalorder %s157, %s158
      %p169 = scmp.eq.s32.totalorder %s23, 0
      %p170 = por %p168, %p169
      %p171 = scmp.ne.s32.totalorder %s157, %s158
      %p172 = scmp.eq.s32.totalorder %s24, 39
      %p173 = por %p171, %p172
      %p175 = scmp.ne.s32.totalorder %s158, %s174
      %p176 = scmp.eq.s32.totalorder %s24, 0
      %p177 = por %p175, %p176
      %s178 = ssub.s32 %s26, %s40
      %p179 = scmp.eq.s32.totalorder %s178, 0
      %s181 = sadd.s32 %s180, 1
      %s182 = scalar_select %p179, %s180, %s181
      %p185 = pneg %p179
      %p186 = scmp.eq.s32.totalorder %s18, 39
      %p187 = por %p185, %p186
      %p188 = scmp.ne.s32.totalorder %s180, %s183
      %p189 = scmp.eq.s32.totalorder %s18, 0
      %p190 = por %p188, %p189
      %p191 = scmp.ne.s32.totalorder %s180, %s183
      %p192 = scmp.eq.s32.totalorder %s23, 39
      %p193 = por %p191, %p192
      %p194 = scmp.ne.s32.totalorder %s183, %s184
      %p195 = scmp.eq.s32.totalorder %s23, 0
      %p196 = por %p194, %p195
      %p197 = scmp.ne.s32.totalorder %s183, %s184
      %p198 = scmp.eq.s32.totalorder %s24, 39
      %p199 = por %p197, %p198
      %p201 = scmp.ne.s32.totalorder %s184, %s200
      %p202 = scmp.eq.s32.totalorder %s24, 0
      %p203 = por %p201, %p202
      %s204 = ssub.s32 %s26, %s40
      %p205 = scmp.eq.s32.totalorder %s204, 0
      %s207 = sadd.s32 %s206, 1
      %s208 = scalar_select %p205, %s206, %s207
      %p211 = pneg %p205
      %p212 = scmp.eq.s32.totalorder %s18, 39
      %p213 = por %p211, %p212
      %p214 = scmp.ne.s32.totalorder %s206, %s209
      %p215 = scmp.eq.s32.totalorder %s18, 0
      %p216 = por %p214, %p215
      %p217 = scmp.ne.s32.totalorder %s206, %s209
      %p218 = scmp.eq.s32.totalorder %s23, 39
      %p219 = por %p217, %p218
      %p220 = scmp.ne.s32.totalorder %s209, %s210
      %p221 = scmp.eq.s32.totalorder %s23, 0
      %p222 = por %p220, %p221
      %p223 = scmp.ne.s32.totalorder %s209, %s210
      %p224 = scmp.eq.s32.totalorder %s24, 39
      %p225 = por %p223, %p224
      %p227 = scmp.ne.s32.totalorder %s210, %s226
      %p228 = scmp.eq.s32.totalorder %s24, 0
      %p229 = por %p227, %p228
      %p230 = scmp.le.s32.totalorder 1, %s18
      %p231 = scmp.lt.s32.totalorder %s18, 41
      %p232 = pnand %p230, %p231
      %p233 = pneg %p232
      // Predicated region
      $region9: #{tpu_custom_call.1} parent=5 // pred_check
        _
      $region10: #{tpu_custom_call.1} parent=5 // pred_check_branch
        %235 = sbr.rel (%p232) target = $region12
      $region11: #{tpu_custom_call.1} parent=5 // pred_region
        %s236 = ssub.s32 %s18, 1
        // Predicated region
        $region13: #{tpu_custom_call.1} parent=11 // pred_check
          %p237 = pneg %p58
        $region14: #{tpu_custom_call.1} parent=11 // pred_check_branch
          %239 = sbr.rel (%p237) target = $region16
        $region15: #{tpu_custom_call.1} parent=11 // pred_region
          %241 = vsyncadd [#allocation5], 0
          %s242 = sshll.u32 %s0, 4
          %s243 = int_to_ptr.hbm [resolvable:$true] %s242
          %s244 = sshll.u32 [#allocation4], 4
          %s245 = int_to_ptr.vmem [resolvable:$true] %s244
          %250 = dma.hbm_to_vmem [thread:$0]  %s243, 2048, %s245, [#allocation5], 64, 64, 4
        $region16: #{tpu_custom_call.1} parent=11 // pred_fallthru
          _
        // Predicated region
        $region17: #{tpu_custom_call.1} parent=11 // pred_check
          %p251 = pneg %p79
        $region18: #{tpu_custom_call.1} parent=11 // pred_check_branch
          %253 = sbr.rel (%p251) target = $region20
        $region19: #{tpu_custom_call.1} parent=11 // pred_region
          %255 = vsyncadd [#allocation8], 0
          %s256 = sshll.u32 %s1, 4
          %s257 = int_to_ptr.hbm [resolvable:$true] %s256
          %s258 = sshll.u32 [#allocation7], 4
          %s259 = int_to_ptr.vmem [resolvable:$true] %s258
          %264 = dma.hbm_to_vmem [thread:$0]  %s257, 1024, %s259, [#allocation8], 64, 64, 4
        $region20: #{tpu_custom_call.1} parent=11 // pred_fallthru
          _
        // Predicated region
        $region21: #{tpu_custom_call.1} parent=11 // pred_check
          %p265 = pneg %p100
        $region22: #{tpu_custom_call.1} parent=11 // pred_check_branch
          %267 = sbr.rel (%p265) target = $region24
        $region23: #{tpu_custom_call.1} parent=11 // pred_region
          _
        $region24: #{tpu_custom_call.1} parent=11 // pred_fallthru
          _
        // Predicated region
        $region25: #{tpu_custom_call.1} parent=11 // pred_check
          %p268 = pneg %p121
        $region26: #{tpu_custom_call.1} parent=11 // pred_check_branch
          %270 = sbr.rel (%p268) target = $region28
        $region27: #{tpu_custom_call.1} parent=11 // pred_region
          %272 = vsyncadd [#allocation8], 0
          %s273 = sshll.u32 %s3, 4
          %s274 = int_to_ptr.hbm [resolvable:$true] %s273
          %s275 = sshll.u32 [#allocation9], 4
          %s276 = int_to_ptr.vmem [resolvable:$true] %s275
          %281 = dma.hbm_to_vmem [thread:$0]  %s274, 1024, %s276, [#allocation8], 64, 64, 4
        $region28: #{tpu_custom_call.1} parent=11 // pred_fallthru
          _
        // Predicated region
        $region29: #{tpu_custom_call.1} parent=11 // pred_check
          %p282 = pneg %p142
        $region30: #{tpu_custom_call.1} parent=11 // pred_check_branch
          %284 = sbr.rel (%p282) target = $region32
        $region31: #{tpu_custom_call.1} parent=11 // pred_region
          _
        $region32: #{tpu_custom_call.1} parent=11 // pred_fallthru
          _
      $region12: #{tpu_custom_call.1} parent=5 // pred_fallthru
        _
      %p285 = scmp.lt.s32.totalorder %s18, 40
      // Predicated region
      $region33: #{tpu_custom_call.1} parent=5 // pred_check
        %p286 = pneg %p285
      $region34: #{tpu_custom_call.1} parent=5 // pred_check_branch
        %288 = sbr.rel (%p286) target = $region36
      $region35: #{tpu_custom_call.1} parent=5 // pred_region
        // Predicated region
        $region37: #{tpu_custom_call.1} parent=35 // pred_check
          %p289 = pneg %p164
        $region38: #{tpu_custom_call.1} parent=35 // pred_check_branch
          %291 = sbr.rel (%p289) target = $region40
        $region39: #{tpu_custom_call.1} parent=35 // pred_region
          %s292 = sand.u32 %s154, 1
          %s293 = sand.u32 %s154, 1
          %s294 = smul.addr %s293, 64
          %s295 = scalar_lea.vmem [#allocation10], %s294
          %s296 = smul.u32 16, %s26
          %s297 = smul.addr %s296, 2
          %s298 = sadd.s32 %s27, %s297
          %s299 = smul.addr %s298, 4
          %s300 = scalar_lea.vmem %s5, %s299
          // Predicated region
          $region41: #{tpu_custom_call.1} parent=39 // pred_check
            _
          $region42: #{tpu_custom_call.1} parent=39 // pred_check_branch
            %302 = sbr.rel (0) target = $region44
          $region43: #{tpu_custom_call.1} parent=39 // pred_region
            // Predicated region
            $region45: #{tpu_custom_call.1} parent=43 // pred_check
              _
            $region46: #{tpu_custom_call.1} parent=43 // pred_check_branch
              %304 = sbr.rel target = $region48
            $region47: #{tpu_custom_call.1} parent=43 // pred_region
              // Predicated region
              $region60: #{tpu_custom_call.1} parent=47 // pred_check
                _
              $region61: #{tpu_custom_call.1} parent=47 // pred_check_branch
                %350 = sbr.rel (0) target = $region63
              $region62: #{tpu_custom_call.1} parent=47 // pred_region
                loop: start=0, step=1, limit=1
                $region64: #{tpu_custom_call.1} parent=62 // loop_pre_header
                  _
                $region65: #{tpu_custom_call.1} parent=62 // loop_header
                  %s352 = sphi 0, %s356
                  %p353 = scmp.ge.s32.totalorder %s352, 1
                  %s357 = sphi %s300, %s300
                  %s358 = sphi %s295, %s295
                $region66: #{tpu_custom_call.1} parent=62 // loop_header_branch
                  %355 = sbr.rel (%p353) target = $region70
                $region67: #{tpu_custom_call.1} parent=62 // loop_body
                  _
                $region68: #{tpu_custom_call.1} parent=62 // loop_footer
                  %s356 = sadd.s32 1, %s352
                $region69: #{tpu_custom_call.1} parent=62 // loop_footer_branch
                  %351 = sbr.rel target = $region65
                $region70: #{tpu_custom_call.1} parent=62 // loop_exit
                  _
                %s360 = ssub.s32 16, 1
                loop: start=0, step=1, limit=1
                $region71: #{tpu_custom_call.1} parent=62 // loop_pre_header
                  _
                $region72: #{tpu_custom_call.1} parent=62 // loop_header
                  %s362 = sphi 0, %s366
                  %p363 = scmp.ge.s32.totalorder %s362, 1
                  %s367 = sphi %s300, %s300
                  %s368 = sphi %s295, %s295
                $region73: #{tpu_custom_call.1} parent=62 // loop_header_branch
                  %365 = sbr.rel (%p363) target = $region77
                $region74: #{tpu_custom_call.1} parent=62 // loop_body
                  %v369 = vld [vmem:[%s367] sm:%s360]
                  %370 = vst [vmem:[%s368] sm:%s360] %v369
                  %v371 = vld [vmem:[%s367 + $0x8] sm:%s360]
                  %372 = vst [vmem:[%s368 + $0x4] sm:%s360] %v371
                  %v373 = vld [vmem:[%s367 + $0x10] sm:%s360]
                  %374 = vst [vmem:[%s368 + $0x8] sm:%s360] %v373
                  %v375 = vld [vmem:[%s367 + $0x18] sm:%s360]
                  %376 = vst [vmem:[%s368 + $0xc] sm:%s360] %v375
                  %v377 = vld [vmem:[%s367 + $0x20] sm:%s360]
                  %378 = vst [vmem:[%s368 + $0x10] sm:%s360] %v377
                  %v379 = vld [vmem:[%s367 + $0x28] sm:%s360]
                  %380 = vst [vmem:[%s368 + $0x14] sm:%s360] %v379
                  %v381 = vld [vmem:[%s367 + $0x30] sm:%s360]
                  %382 = vst [vmem:[%s368 + $0x18] sm:%s360] %v381
                  %v383 = vld [vmem:[%s367 + $0x38] sm:%s360]
                  %384 = vst [vmem:[%s368 + $0x1c] sm:%s360] %v383
                  %v385 = vld [vmem:[%s367 + $0x40] sm:%s360]
                  %386 = vst [vmem:[%s368 + $0x20] sm:%s360] %v385
                  %v387 = vld [vmem:[%s367 + $0x48] sm:%s360]
                  %388 = vst [vmem:[%s368 + $0x24] sm:%s360] %v387
                  %v389 = vld [vmem:[%s367 + $0x50] sm:%s360]
                  %390 = vst [vmem:[%s368 + $0x28] sm:%s360] %v389
                  %v391 = vld [vmem:[%s367 + $0x58] sm:%s360]
                  %392 = vst [vmem:[%s368 + $0x2c] sm:%s360] %v391
                  %v393 = vld [vmem:[%s367 + $0x60] sm:%s360]
                  %394 = vst [vmem:[%s368 + $0x30] sm:%s360] %v393
                  %v395 = vld [vmem:[%s367 + $0x68] sm:%s360]
                  %396 = vst [vmem:[%s368 + $0x34] sm:%s360] %v395
                  %v397 = vld [vmem:[%s367 + $0x70] sm:%s360]
                  %398 = vst [vmem:[%s368 + $0x38] sm:%s360] %v397
                  %v399 = vld [vmem:[%s367 + $0x78] sm:%s360]
                  %400 = vst [vmem:[%s368 + $0x3c] sm:%s360] %v399
                $region75: #{tpu_custom_call.1} parent=62 // loop_footer
                  %s366 = sadd.s32 1, %s362
                $region76: #{tpu_custom_call.1} parent=62 // loop_footer_branch
                  %361 = sbr.rel target = $region72
                $region77: #{tpu_custom_call.1} parent=62 // loop_exit
                  _
              $region63: #{tpu_custom_call.1} parent=47 // pred_fallthru
                _
            $region48: #{tpu_custom_call.1} parent=43 // pred_fallthru
              _
            // Predicated region
            $region49: #{tpu_custom_call.1} parent=43 // pred_check
              _
            $region50: #{tpu_custom_call.1} parent=43 // pred_check_branch
              %306 = sbr.rel (0) target = $region52
            $region51: #{tpu_custom_call.1} parent=43 // pred_region
              %s308 = ssub.s32 16, 1
              loop: start=0, step=1, limit=1
              $region53: #{tpu_custom_call.1} parent=51 // loop_pre_header
                _
              $region54: #{tpu_custom_call.1} parent=51 // loop_header
                %s310 = sphi 0, %s314
                %p311 = scmp.ge.s32.totalorder %s310, 1
                %s315 = sphi %s300, %s300
                %s316 = sphi %s295, %s295
              $region55: #{tpu_custom_call.1} parent=51 // loop_header_branch
                %313 = sbr.rel (%p311) target = $region59
              $region56: #{tpu_custom_call.1} parent=51 // loop_body
                %v317 = vld [vmem:[%s315] sm:%s308]
                %318 = vst [vmem:[%s316] sm:%s308] %v317
                %v319 = vld [vmem:[%s315 + $0x8] sm:%s308]
                %320 = vst [vmem:[%s316 + $0x4] sm:%s308] %v319
                %v321 = vld [vmem:[%s315 + $0x10] sm:%s308]
                %322 = vst [vmem:[%s316 + $0x8] sm:%s308] %v321
                %v323 = vld [vmem:[%s315 + $0x18] sm:%s308]
                %324 = vst [vmem:[%s316 + $0xc] sm:%s308] %v323
                %v325 = vld [vmem:[%s315 + $0x20] sm:%s308]
                %326 = vst [vmem:[%s316 + $0x10] sm:%s308] %v325
                %v327 = vld [vmem:[%s315 + $0x28] sm:%s308]
                %328 = vst [vmem:[%s316 + $0x14] sm:%s308] %v327
                %v329 = vld [vmem:[%s315 + $0x30] sm:%s308]
                %330 = vst [vmem:[%s316 + $0x18] sm:%s308] %v329
                %v331 = vld [vmem:[%s315 + $0x38] sm:%s308]
                %332 = vst [vmem:[%s316 + $0x1c] sm:%s308] %v331
                %v333 = vld [vmem:[%s315 + $0x40] sm:%s308]
                %334 = vst [vmem:[%s316 + $0x20] sm:%s308] %v333
                %v335 = vld [vmem:[%s315 + $0x48] sm:%s308]
                %336 = vst [vmem:[%s316 + $0x24] sm:%s308] %v335
                %v337 = vld [vmem:[%s315 + $0x50] sm:%s308]
                %338 = vst [vmem:[%s316 + $0x28] sm:%s308] %v337
                %v339 = vld [vmem:[%s315 + $0x58] sm:%s308]
                %340 = vst [vmem:[%s316 + $0x2c] sm:%s308] %v339
                %v341 = vld [vmem:[%s315 + $0x60] sm:%s308]
                %342 = vst [vmem:[%s316 + $0x30] sm:%s308] %v341
                %v343 = vld [vmem:[%s315 + $0x68] sm:%s308]
                %344 = vst [vmem:[%s316 + $0x34] sm:%s308] %v343
                %v345 = vld [vmem:[%s315 + $0x70] sm:%s308]
                %346 = vst [vmem:[%s316 + $0x38] sm:%s308] %v345
                %v347 = vld [vmem:[%s315 + $0x78] sm:%s308]
                %348 = vst [vmem:[%s316 + $0x3c] sm:%s308] %v347
              $region57: #{tpu_custom_call.1} parent=51 // loop_footer
                %s314 = sadd.s32 1, %s310
              $region58: #{tpu_custom_call.1} parent=51 // loop_footer_branch
                %309 = sbr.rel target = $region54
              $region59: #{tpu_custom_call.1} parent=51 // loop_exit
                _
            $region52: #{tpu_custom_call.1} parent=43 // pred_fallthru
              _
          $region44: #{tpu_custom_call.1} parent=39 // pred_fallthru
            _
          %401 = vnop
        $region40: #{tpu_custom_call.1} parent=35 // pred_fallthru
          _
        // Predicated region
        $region78: #{tpu_custom_call.1} parent=35 // pred_check
          %p402 = pneg %p190
        $region79: #{tpu_custom_call.1} parent=35 // pred_check_branch
          %404 = sbr.rel (%p402) target = $region81
        $region80: #{tpu_custom_call.1} parent=35 // pred_region
          %s405 = smul.u32 16, %s26
          %p406 = scmp.lt.s32.totalorder %s405, 31
          %s407 = scalar_select %p406, %s405, 31
          %s408 = smul.addr %s407, 8
          %s409 = scalar_lea.vmem %s6, %s408
          %s410 = smul.u32 16, %s26
        $region81: #{tpu_custom_call.1} parent=35 // pred_fallthru
          _
      $region36: #{tpu_custom_call.1} parent=5 // pred_fallthru
        _
      %p411 = scmp.le.s32.totalorder 1, %s18
      %p412 = scmp.lt.s32.totalorder %s18, 41
      %p413 = pnand %p411, %p412
      %p414 = pneg %p413
      // Predicated region
      $region82: #{tpu_custom_call.1} parent=5 // pred_check
        _
      $region83: #{tpu_custom_call.1} parent=5 // pred_check_branch
        %416 = sbr.rel (%p413) target = $region85
      $region84: #{tpu_custom_call.1} parent=5 // pred_region
        %s417 = ssub.s32 %s18, 1
        // Predicated region
        $region86: #{tpu_custom_call.1} parent=84 // pred_check
          %p418 = pneg %p58
        $region87: #{tpu_custom_call.1} parent=84 // pred_check_branch
          %420 = sbr.rel (%p418) target = $region89
        $region88: #{tpu_custom_call.1} parent=84 // pred_region
          %422 = dma.done [#allocation5], 2048
        $region89: #{tpu_custom_call.1} parent=84 // pred_fallthru
          _
        // Predicated region
        $region90: #{tpu_custom_call.1} parent=84 // pred_check
          %p423 = pneg %p79
        $region91: #{tpu_custom_call.1} parent=84 // pred_check_branch
          %425 = sbr.rel (%p423) target = $region93
        $region92: #{tpu_custom_call.1} parent=84 // pred_region
          %427 = dma.done [#allocation8], 1024
        $region93: #{tpu_custom_call.1} parent=84 // pred_fallthru
          _
        // Predicated region
        $region94: #{tpu_custom_call.1} parent=84 // pred_check
          %p428 = pneg %p121
        $region95: #{tpu_custom_call.1} parent=84 // pred_check_branch
          %430 = sbr.rel (%p428) target = $region97
        $region96: #{tpu_custom_call.1} parent=84 // pred_region
          %432 = dma.done [#allocation8], 1024
        $region97: #{tpu_custom_call.1} parent=84 // pred_fallthru
          _
        %s433 = sand.u32 %s157, 1
        %s434 = sand.u32 %s157, 1
        %s435 = smul.addr %s434, 64
        %s436 = scalar_lea.vmem [#allocation10], %s435
        // Predicated region
        $region98: #{tpu_custom_call.1} parent=84 // pred_check
          %p437 = pneg %p170
        $region99: #{tpu_custom_call.1} parent=84 // pred_check_branch
          %439 = sbr.rel (%p437) target = $region101
        $region100: #{tpu_custom_call.1} parent=84 // pred_region
          _
        $region101: #{tpu_custom_call.1} parent=84 // pred_fallthru
          _
        %p440 = pneg %p58
        %p441 = pneg %p55
        %p442 = pneg %p79
        %p443 = pneg %p76
        %p444 = pneg %p100
        %p445 = pneg %p97
        %p446 = pneg %p121
        %p447 = pneg %p118
        %p448 = pneg %p142
        %p449 = pneg %p139
        %s450 = sand.u32 %s157, 1
        %s451 = sand.u32 %s157, 1
        %s452 = smul.addr %s451, 64
        %s453 = scalar_lea.vmem [#allocation10], %s452
        %p454 = pneg %p170
        %p455 = pneg %p167
        %s456 = smul.u32 16, %s29
        %p457 = scmp.lt.s32.totalorder %s456, 31
        %s458 = scalar_select %p457, %s456, 31
        %s459 = smul.addr %s458, 8
        %s460 = scalar_lea.vmem %s6, %s459
        %p461 = pneg %p196
        %p462 = pneg %p193
        %p463 = pneg %p222
        %p464 = pneg %p219
        %s465 = sand.u32 %s209, 1
        %s466 = scalar_lea.sflag [#allocation6], %s465
        %s467 = sand.u32 %s209, 1
        %s468 = smul.addr %s467, 128
        %s469 = scalar_lea.vmem [#allocation11], %s468
        %s470 = smul.u32 16, %s29
        %s471 = smul.u32 16, %s29
        %p472 = scmp.lt.s32.totalorder %s471, 31
        %s473 = scalar_select %p472, %s471, 31
        %s474 = smul.addr %s473, 8
        %s475 = scalar_lea.vmem %s6, %s474
        %s476 = smul.u32 16, %s29
        %s477 = smul.u32 16, %s29
        %p478 = scmp.lt.s32.totalorder %s28, 0
        %s479 = ssub.s32 0, %s28
        %s480 = scalar_select %p478, %s479, %s28
        %s481 = sand.u32 %s480, 1
        %s482 = ssub.s32 0, %s481
        %s483 = scalar_select %p478, %s482, %s481
        %p484 = scmp.ne.s32.totalorder %s483, 0
        %p485 = scmp.lt.s32.totalorder %s483, 0
        %p486 = pnand %p485, %p484
        %p487 = pneg %p486
        %s488 = sadd.s32 %s483, 2
        %s489 = scalar_select %p487, %s488, %s483
        %s490 = sadd.s32 %s28, 1
        %p491 = scmp.lt.s32.totalorder %s490, 0
        %s492 = ssub.s32 0, %s490
        %s493 = scalar_select %p491, %s492, %s490
        %s494 = sand.u32 %s493, 1
        %s495 = ssub.s32 0, %s494
        %s496 = scalar_select %p491, %s495, %s494
        %p497 = scmp.ne.s32.totalorder %s496, 0
        %p498 = scmp.lt.s32.totalorder %s496, 0
        %p499 = pnand %p498, %p497
        %p500 = pneg %p499
        %s501 = sadd.s32 %s496, 2
        %s502 = scalar_select %p500, %s501, %s496
        %p503 = scmp.eq.s32.totalorder %s28, 0
        %p504 = scmp.eq.s32.totalorder %s29, 0
        %p505 = pnand %p503, %p504
        %p506 = pneg %p505
        %p507 = scmp.eq.s32.totalorder %s30, 0
        %p508 = pnand %p506, %p507
        %p509 = pneg %p508
        // Predicated region
        $region102: #{tpu_custom_call.1} parent=84 // pred_check
          _
        $region103: #{tpu_custom_call.1} parent=84 // pred_check_branch
          %511 = sbr.rel (%p508) target = $region105
        $region104: #{tpu_custom_call.1} parent=84 // pred_region
          %v512 = vld [vmem:[#allocation4] sm:$0xf]
          %v513 = vld [vmem:[#allocation4 + $0x4] sm:$0xf]
          %v514 = vld [vmem:[#allocation4 + $0x8] sm:$0xf]
          %v515 = vld [vmem:[#allocation4 + $0xc] sm:$0xf]
          %v516 = vld [vmem:[#allocation4 + $0x10] sm:$0xf]
          %v517 = vld [vmem:[#allocation4 + $0x14] sm:$0xf]
          %v518 = vld [vmem:[#allocation4 + $0x18] sm:$0xf]
          %v519 = vld [vmem:[#allocation4 + $0x1c] sm:$0xf]
          %v520 = vld [vmem:[#allocation4 + $0x20] sm:$0xf]
          %v521 = vld [vmem:[#allocation4 + $0x24] sm:$0xf]
          %v522 = vld [vmem:[#allocation4 + $0x28] sm:$0xf]
          %v523 = vld [vmem:[#allocation4 + $0x2c] sm:$0xf]
          %v524 = vld [vmem:[#allocation4 + $0x30] sm:$0xf]
          %v525 = vld [vmem:[#allocation4 + $0x34] sm:$0xf]
          %v526 = vld [vmem:[#allocation4 + $0x38] sm:$0xf]
          %v527 = vld [vmem:[#allocation4 + $0x3c] sm:$0xf]
          %v528 = vld [vmem:[#allocation4 + $0x40] sm:$0xf]
          %v529 = vld [vmem:[#allocation4 + $0x44] sm:$0xf]
          %v530 = vld [vmem:[#allocation4 + $0x48] sm:$0xf]
          %v531 = vld [vmem:[#allocation4 + $0x4c] sm:$0xf]
          %v532 = vld [vmem:[#allocation4 + $0x50] sm:$0xf]
          %v533 = vld [vmem:[#allocation4 + $0x54] sm:$0xf]
          %v534 = vld [vmem:[#allocation4 + $0x58] sm:$0xf]
          %v535 = vld [vmem:[#allocation4 + $0x5c] sm:$0xf]
          %v536 = vld [vmem:[#allocation4 + $0x60] sm:$0xf]
          %v537 = vld [vmem:[#allocation4 + $0x64] sm:$0xf]
          %v538 = vld [vmem:[#allocation4 + $0x68] sm:$0xf]
          %v539 = vld [vmem:[#allocation4 + $0x6c] sm:$0xf]
          %v540 = vld [vmem:[#allocation4 + $0x70] sm:$0xf]
          %v541 = vld [vmem:[#allocation4 + $0x74] sm:$0xf]
          %v542 = vld [vmem:[#allocation4 + $0x78] sm:$0xf]
          %v543 = vld [vmem:[#allocation4 + $0x7c] sm:$0xf]
          %v544 = vld [vmem:[#allocation7] sm:$0xf]
          %v545 = vld [vmem:[#allocation7 + $0x4] sm:$0xf]
          %v546 = vld [vmem:[#allocation7 + $0x8] sm:$0xf]
          %v547 = vld [vmem:[#allocation7 + $0xc] sm:$0xf]
          %v548 = vld [vmem:[#allocation7 + $0x10] sm:$0xf]
          %v549 = vld [vmem:[#allocation7 + $0x14] sm:$0xf]
          %v550 = vld [vmem:[#allocation7 + $0x18] sm:$0xf]
          %v551 = vld [vmem:[#allocation7 + $0x1c] sm:$0xf]
          %v552 = vld [vmem:[#allocation7 + $0x20] sm:$0xf]
          %v553 = vld [vmem:[#allocation7 + $0x24] sm:$0xf]
          %v554 = vld [vmem:[#allocation7 + $0x28] sm:$0xf]
          %v555 = vld [vmem:[#allocation7 + $0x2c] sm:$0xf]
          %v556 = vld [vmem:[#allocation7 + $0x30] sm:$0xf]
          %v557 = vld [vmem:[#allocation7 + $0x34] sm:$0xf]
          %v558 = vld [vmem:[#allocation7 + $0x38] sm:$0xf]
          %v559 = vld [vmem:[#allocation7 + $0x3c] sm:$0xf]
          %v560 = vld [vmem:[%s2] sm:$0x1]
          %v562 = vperm.slane %v560, 0
          %v596 = vunpack.c.l.b16 %v512
          %v597 = vunpack.c.l.b16 %v513
          %v598 = vunpack.c.l.b16 %v514
          %v599 = vunpack.c.l.b16 %v515
          %v600 = vunpack.c.l.b16 %v516
          %v601 = vunpack.c.l.b16 %v517
          %v602 = vunpack.c.l.b16 %v518
          %v603 = vunpack.c.l.b16 %v519
          %v604 = vunpack.c.l.b16 %v520
          %v605 = vunpack.c.l.b16 %v521
          %v606 = vunpack.c.l.b16 %v522
          %v607 = vunpack.c.l.b16 %v523
          %v608 = vunpack.c.l.b16 %v524
          %v609 = vunpack.c.l.b16 %v525
          %v610 = vunpack.c.l.b16 %v526
          %v611 = vunpack.c.l.b16 %v527
          %v612 = vunpack.c.l.b16 %v528
          %v613 = vunpack.c.l.b16 %v529
          %v614 = vunpack.c.l.b16 %v530
          %v615 = vunpack.c.l.b16 %v531
          %v616 = vunpack.c.l.b16 %v532
          %v617 = vunpack.c.l.b16 %v533
          %v618 = vunpack.c.l.b16 %v534
          %v619 = vunpack.c.l.b16 %v535
          %v620 = vunpack.c.l.b16 %v536
          %v621 = vunpack.c.l.b16 %v537
          %v622 = vunpack.c.l.b16 %v538
          %v623 = vunpack.c.l.b16 %v539
          %v624 = vunpack.c.l.b16 %v540
          %v625 = vunpack.c.l.b16 %v541
          %v626 = vunpack.c.l.b16 %v542
          %v627 = vunpack.c.l.b16 %v543
          %v628 = vpack.c.b16 %v597, %v596
          %v629 = vpack.c.b16 %v599, %v598
          %v630 = vpack.c.b16 %v601, %v600
          %v631 = vpack.c.b16 %v603, %v602
          %v632 = vpack.c.b16 %v605, %v604
          %v633 = vpack.c.b16 %v607, %v606
          %v634 = vpack.c.b16 %v609, %v608
          %v635 = vpack.c.b16 %v611, %v610
          %v636 = vpack.c.b16 %v613, %v612
          %v637 = vpack.c.b16 %v615, %v614
          %v638 = vpack.c.b16 %v617, %v616
          %v639 = vpack.c.b16 %v619, %v618
          %v640 = vpack.c.b16 %v621, %v620
          %v641 = vpack.c.b16 %v623, %v622
          %v642 = vpack.c.b16 %v625, %v624
          %v643 = vpack.c.b16 %v627, %v626
          %v676 = vunpack.c.l.b16 %v544
          %v677 = vunpack.c.l.b16 %v545
          %v678 = vunpack.c.l.b16 %v546
          %v679 = vunpack.c.l.b16 %v547
          %v680 = vunpack.c.l.b16 %v548
          %v681 = vunpack.c.l.b16 %v549
          %v682 = vunpack.c.l.b16 %v550
          %v683 = vunpack.c.l.b16 %v551
          %v684 = vunpack.c.l.b16 %v552
          %v685 = vunpack.c.l.b16 %v553
          %v686 = vunpack.c.l.b16 %v554
          %v687 = vunpack.c.l.b16 %v555
          %v688 = vunpack.c.l.b16 %v556
          %v689 = vunpack.c.l.b16 %v557
          %v690 = vunpack.c.l.b16 %v558
          %v691 = vunpack.c.l.b16 %v559
          %v692 = vpack.c.b16 %v677, %v676
          %v693 = vpack.c.b16 %v679, %v678
          %v694 = vpack.c.b16 %v681, %v680
          %v695 = vpack.c.b16 %v683, %v682
          %v696 = vpack.c.b16 %v685, %v684
          %v697 = vpack.c.b16 %v687, %v686
          %v698 = vpack.c.b16 %v689, %v688
          %v699 = vpack.c.b16 %v691, %v690
          %708 = vmatpush.bf16.msra.mxu0 %v699
          %709 = vmatpush.bf16.msra.mxu0 %v698
          %710 = vmatpush.bf16.msra.mxu0 %v697
          %711 = vmatpush.bf16.msra.mxu0 %v696
          %712 = vmatpush.bf16.msra.mxu0 %v695
          %713 = vmatpush.bf16.msra.mxu0 %v694
          %714 = vmatpush.bf16.msra.mxu0 %v693
          %715 = vmatpush.bf16.msra.mxu0 %v692
          %716 = vmatmul.bf16.gmra.mxu0 %v628
          %v717 = vpop.f32.mrf.mxu0
          %v718 = vadd.f32 %v562, %v717
          %v719 = vpop.f32.mrf.mxu0
          %v720 = vadd.f32 %v562, %v719
          %721 = vmatmul.bf16.gmra.mxu0 %v629
          %v722 = vpop.f32.mrf.mxu0
          %v723 = vadd.f32 %v562, %v722
          %v724 = vpop.f32.mrf.mxu0
          %v725 = vadd.f32 %v562, %v724
          %726 = vmatmul.bf16.gmra.mxu0 %v630
          %v727 = vpop.f32.mrf.mxu0
          %v728 = vadd.f32 %v562, %v727
          %v729 = vpop.f32.mrf.mxu0
          %v730 = vadd.f32 %v562, %v729
          %731 = vmatmul.bf16.gmra.mxu0 %v631
          %v732 = vpop.f32.mrf.mxu0
          %v733 = vadd.f32 %v562, %v732
          %v734 = vpop.f32.mrf.mxu0
          %v735 = vadd.f32 %v562, %v734
          %736 = vmatmul.bf16.gmra.mxu0 %v632
          %v737 = vpop.f32.mrf.mxu0
          %v738 = vadd.f32 %v562, %v737
          %v739 = vpop.f32.mrf.mxu0
          %v740 = vadd.f32 %v562, %v739
          %741 = vmatmul.bf16.gmra.mxu0 %v633
          %v742 = vpop.f32.mrf.mxu0
          %v743 = vadd.f32 %v562, %v742
          %v744 = vpop.f32.mrf.mxu0
          %v745 = vadd.f32 %v562, %v744
          %746 = vmatmul.bf16.gmra.mxu0 %v634
          %v747 = vpop.f32.mrf.mxu0
          %v748 = vadd.f32 %v562, %v747
          %v749 = vpop.f32.mrf.mxu0
          %v750 = vadd.f32 %v562, %v749
          %751 = vmatmul.bf16.gmra.mxu0 %v635
          %v752 = vpop.f32.mrf.mxu0
          %v753 = vadd.f32 %v562, %v752
          %v754 = vpop.f32.mrf.mxu0
          %v755 = vadd.f32 %v562, %v754
          %756 = vmatmul.bf16.gmra.mxu0 %v636
          %v757 = vpop.f32.mrf.mxu0
          %v758 = vadd.f32 %v562, %v757
          %v759 = vpop.f32.mrf.mxu0
          %v760 = vadd.f32 %v562, %v759
          %761 = vmatmul.bf16.gmra.mxu0 %v637
          %v762 = vpop.f32.mrf.mxu0
          %v763 = vadd.f32 %v562, %v762
          %v764 = vpop.f32.mrf.mxu0
          %v765 = vadd.f32 %v562, %v764
          %766 = vmatmul.bf16.gmra.mxu0 %v638
          %v767 = vpop.f32.mrf.mxu0
          %v768 = vadd.f32 %v562, %v767
          %v769 = vpop.f32.mrf.mxu0
          %v770 = vadd.f32 %v562, %v769
          %771 = vmatmul.bf16.gmra.mxu0 %v639
          %v772 = vpop.f32.mrf.mxu0
          %v773 = vadd.f32 %v562, %v772
          %v774 = vpop.f32.mrf.mxu0
          %v775 = vadd.f32 %v562, %v774
          %776 = vmatmul.bf16.gmra.mxu0 %v640
          %v777 = vpop.f32.mrf.mxu0
          %v778 = vadd.f32 %v562, %v777
          %v779 = vpop.f32.mrf.mxu0
          %v780 = vadd.f32 %v562, %v779
          %781 = vmatmul.bf16.gmra.mxu0 %v641
          %v782 = vpop.f32.mrf.mxu0
          %v783 = vadd.f32 %v562, %v782
          %v784 = vpop.f32.mrf.mxu0
          %v785 = vadd.f32 %v562, %v784
          %786 = vmatmul.bf16.gmra.mxu0 %v642
          %v787 = vpop.f32.mrf.mxu0
          %v788 = vadd.f32 %v562, %v787
          %v789 = vpop.f32.mrf.mxu0
          %v790 = vadd.f32 %v562, %v789
          %791 = vmatmul.bf16.gmra.mxu0 %v643
          %v792 = vpop.f32.mrf.mxu0
          %v793 = vadd.f32 %v562, %v792
          %v794 = vpop.f32.mrf.mxu0
          %v795 = vadd.f32 %v562, %v794
          %796 = vdwg.mxu0
          %v797 = vmax.f32 %v718, 0.0
          %v798 = vmax.f32 %v720, 0.0
          %v799 = vmax.f32 %v723, 0.0
          %v800 = vmax.f32 %v725, 0.0
          %v801 = vmax.f32 %v728, 0.0
          %v802 = vmax.f32 %v730, 0.0
          %v803 = vmax.f32 %v733, 0.0
          %v804 = vmax.f32 %v735, 0.0
          %v805 = vmax.f32 %v738, 0.0
          %v806 = vmax.f32 %v740, 0.0
          %v807 = vmax.f32 %v743, 0.0
          %v808 = vmax.f32 %v745, 0.0
          %v809 = vmax.f32 %v748, 0.0
          %v810 = vmax.f32 %v750, 0.0
          %v811 = vmax.f32 %v753, 0.0
          %v812 = vmax.f32 %v755, 0.0
          %v813 = vmax.f32 %v758, 0.0
          %v814 = vmax.f32 %v760, 0.0
          %v815 = vmax.f32 %v763, 0.0
          %v816 = vmax.f32 %v765, 0.0
          %v817 = vmax.f32 %v768, 0.0
          %v818 = vmax.f32 %v770, 0.0
          %v819 = vmax.f32 %v773, 0.0
          %v820 = vmax.f32 %v775, 0.0
          %v821 = vmax.f32 %v778, 0.0
          %v822 = vmax.f32 %v780, 0.0
          %v823 = vmax.f32 %v783, 0.0
          %v824 = vmax.f32 %v785, 0.0
          %v825 = vmax.f32 %v788, 0.0
          %v826 = vmax.f32 %v790, 0.0
          %v827 = vmax.f32 %v793, 0.0
          %v828 = vmax.f32 %v795, 0.0
          %829 = vst [vmem:[#allocation2] sm:$0xff] %v797
          %830 = vst [vmem:[#allocation2 + $0x8] sm:$0xff] %v798
          %831 = vst [vmem:[#allocation2 + $0x10] sm:$0xff] %v799
          %832 = vst [vmem:[#allocation2 + $0x18] sm:$0xff] %v800
          %833 = vst [vmem:[#allocation2 + $0x20] sm:$0xff] %v801
          %834 = vst [vmem:[#allocation2 + $0x28] sm:$0xff] %v802
          %835 = vst [vmem:[#allocation2 + $0x30] sm:$0xff] %v803
          %836 = vst [vmem:[#allocation2 + $0x38] sm:$0xff] %v804
          %837 = vst [vmem:[#allocation2 + $0x40] sm:$0xff] %v805
          %838 = vst [vmem:[#allocation2 + $0x48] sm:$0xff] %v806
          %839 = vst [vmem:[#allocation2 + $0x50] sm:$0xff] %v807
          %840 = vst [vmem:[#allocation2 + $0x58] sm:$0xff] %v808
          %841 = vst [vmem:[#allocation2 + $0x60] sm:$0xff] %v809
          %842 = vst [vmem:[#allocation2 + $0x68] sm:$0xff] %v810
          %843 = vst [vmem:[#allocation2 + $0x70] sm:$0xff] %v811
          %844 = vst [vmem:[#allocation2 + $0x78] sm:$0xff] %v812
          %845 = vst [vmem:[#allocation2 + $0x80] sm:$0xff] %v813
          %846 = vst [vmem:[#allocation2 + $0x88] sm:$0xff] %v814
          %847 = vst [vmem:[#allocation2 + $0x90] sm:$0xff] %v815
          %848 = vst [vmem:[#allocation2 + $0x98] sm:$0xff] %v816
          %849 = vst [vmem:[#allocation2 + $0xa0] sm:$0xff] %v817
          %850 = vst [vmem:[#allocation2 + $0xa8] sm:$0xff] %v818
          %851 = vst [vmem:[#allocation2 + $0xb0] sm:$0xff] %v819
          %852 = vst [vmem:[#allocation2 + $0xb8] sm:$0xff] %v820
          %853 = vst [vmem:[#allocation2 + $0xc0] sm:$0xff] %v821
          %854 = vst [vmem:[#allocation2 + $0xc8] sm:$0xff] %v822
          %855 = vst [vmem:[#allocation2 + $0xd0] sm:$0xff] %v823
          %856 = vst [vmem:[#allocation2 + $0xd8] sm:$0xff] %v824
          %857 = vst [vmem:[#allocation2 + $0xe0] sm:$0xff] %v825
          %858 = vst [vmem:[#allocation2 + $0xe8] sm:$0xff] %v826
          %859 = vst [vmem:[#allocation2 + $0xf0] sm:$0xff] %v827
          %860 = vst [vmem:[#allocation2 + $0xf8] sm:$0xff] %v828
        $region105: #{tpu_custom_call.1} parent=84 // pred_fallthru
          _
        // Predicated region
        $region106: #{tpu_custom_call.1} parent=84 // pred_check
          %p861 = pneg %p507
        $region107: #{tpu_custom_call.1} parent=84 // pred_check_branch
          %863 = sbr.rel (%p861) target = $region109
        $region108: #{tpu_custom_call.1} parent=84 // pred_region
          %864 = vst [vmem:[#allocation3] sm:$0xff] 0.0
          %865 = vst [vmem:[#allocation3 + $0x8] sm:$0xff] 0.0
          %866 = vst [vmem:[#allocation3 + $0x10] sm:$0xff] 0.0
          %867 = vst [vmem:[#allocation3 + $0x18] sm:$0xff] 0.0
          %868 = vst [vmem:[#allocation3 + $0x20] sm:$0xff] 0.0
          %869 = vst [vmem:[#allocation3 + $0x28] sm:$0xff] 0.0
          %870 = vst [vmem:[#allocation3 + $0x30] sm:$0xff] 0.0
          %871 = vst [vmem:[#allocation3 + $0x38] sm:$0xff] 0.0
          %872 = vst [vmem:[#allocation3 + $0x40] sm:$0xff] 0.0
          %873 = vst [vmem:[#allocation3 + $0x48] sm:$0xff] 0.0
          %874 = vst [vmem:[#allocation3 + $0x50] sm:$0xff] 0.0
          %875 = vst [vmem:[#allocation3 + $0x58] sm:$0xff] 0.0
          %876 = vst [vmem:[#allocation3 + $0x60] sm:$0xff] 0.0
          %877 = vst [vmem:[#allocation3 + $0x68] sm:$0xff] 0.0
          %878 = vst [vmem:[#allocation3 + $0x70] sm:$0xff] 0.0
          %879 = vst [vmem:[#allocation3 + $0x78] sm:$0xff] 0.0
        $region109: #{tpu_custom_call.1} parent=84 // pred_fallthru
          _
        %s880 = smul.u32 %s30, 128
        %s881 = smul.u32 %s489, 256
        %s882 = sadd.s32 %s880, %s881
        %s883 = scalar_lea.vmem [#allocation2], %s882
        %v884 = vld [vmem:[%s883] sm:$0xff]
        %v885 = vld [vmem:[%s883 + $0x8] sm:$0xff]
        %v886 = vld [vmem:[%s883 + $0x10] sm:$0xff]
        %v887 = vld [vmem:[%s883 + $0x18] sm:$0xff]
        %v888 = vld [vmem:[%s883 + $0x20] sm:$0xff]
        %v889 = vld [vmem:[%s883 + $0x28] sm:$0xff]
        %v890 = vld [vmem:[%s883 + $0x30] sm:$0xff]
        %v891 = vld [vmem:[%s883 + $0x38] sm:$0xff]
        %v892 = vld [vmem:[%s883 + $0x40] sm:$0xff]
        %v893 = vld [vmem:[%s883 + $0x48] sm:$0xff]
        %v894 = vld [vmem:[%s883 + $0x50] sm:$0xff]
        %v895 = vld [vmem:[%s883 + $0x58] sm:$0xff]
        %v896 = vld [vmem:[%s883 + $0x60] sm:$0xff]
        %v897 = vld [vmem:[%s883 + $0x68] sm:$0xff]
        %v898 = vld [vmem:[%s883 + $0x70] sm:$0xff]
        %v899 = vld [vmem:[%s883 + $0x78] sm:$0xff]
        %v900 = vld [vmem:[#allocation3] sm:$0xff]
        %v901 = vld [vmem:[#allocation3 + $0x8] sm:$0xff]
        %v902 = vld [vmem:[#allocation3 + $0x10] sm:$0xff]
        %v903 = vld [vmem:[#allocation3 + $0x18] sm:$0xff]
        %v904 = vld [vmem:[#allocation3 + $0x20] sm:$0xff]
        %v905 = vld [vmem:[#allocation3 + $0x28] sm:$0xff]
        %v906 = vld [vmem:[#allocation3 + $0x30] sm:$0xff]
        %v907 = vld [vmem:[#allocation3 + $0x38] sm:$0xff]
        %v908 = vld [vmem:[#allocation3 + $0x40] sm:$0xff]
        %v909 = vld [vmem:[#allocation3 + $0x48] sm:$0xff]
        %v910 = vld [vmem:[#allocation3 + $0x50] sm:$0xff]
        %v911 = vld [vmem:[#allocation3 + $0x58] sm:$0xff]
        %v912 = vld [vmem:[#allocation3 + $0x60] sm:$0xff]
        %v913 = vld [vmem:[#allocation3 + $0x68] sm:$0xff]
        %v914 = vld [vmem:[#allocation3 + $0x70] sm:$0xff]
        %v915 = vld [vmem:[#allocation3 + $0x78] sm:$0xff]
        %v916 = vld [vmem:[%s436] sm:$0xf]
        %v917 = vld [vmem:[%s436 + $0x4] sm:$0xf]
        %v918 = vld [vmem:[%s436 + $0x8] sm:$0xf]
        %v919 = vld [vmem:[%s436 + $0xc] sm:$0xf]
        %v920 = vld [vmem:[%s436 + $0x10] sm:$0xf]
        %v921 = vld [vmem:[%s436 + $0x14] sm:$0xf]
        %v922 = vld [vmem:[%s436 + $0x18] sm:$0xf]
        %v923 = vld [vmem:[%s436 + $0x1c] sm:$0xf]
        %v924 = vld [vmem:[%s436 + $0x20] sm:$0xf]
        %v925 = vld [vmem:[%s436 + $0x24] sm:$0xf]
        %v926 = vld [vmem:[%s436 + $0x28] sm:$0xf]
        %v927 = vld [vmem:[%s436 + $0x2c] sm:$0xf]
        %v928 = vld [vmem:[%s436 + $0x30] sm:$0xf]
        %v929 = vld [vmem:[%s436 + $0x34] sm:$0xf]
        %v930 = vld [vmem:[%s436 + $0x38] sm:$0xf]
        %v931 = vld [vmem:[%s436 + $0x3c] sm:$0xf]
        %v932 = vpack.c.bf16 %v885, %v884
        %v933 = vpack.c.bf16 %v887, %v886
        %v934 = vpack.c.bf16 %v889, %v888
        %v935 = vpack.c.bf16 %v891, %v890
        %v936 = vpack.c.bf16 %v893, %v892
        %v937 = vpack.c.bf16 %v895, %v894
        %v938 = vpack.c.bf16 %v897, %v896
        %v939 = vpack.c.bf16 %v899, %v898
        %v956 = vunpack.c.l.b16 %v916
        %v957 = vunpack.c.l.b16 %v917
        %v958 = vunpack.c.l.b16 %v918
        %v959 = vunpack.c.l.b16 %v919
        %v960 = vunpack.c.l.b16 %v920
        %v961 = vunpack.c.l.b16 %v921
        %v962 = vunpack.c.l.b16 %v922
        %v963 = vunpack.c.l.b16 %v923
        %v964 = vunpack.c.l.b16 %v924
        %v965 = vunpack.c.l.b16 %v925
        %v966 = vunpack.c.l.b16 %v926
        %v967 = vunpack.c.l.b16 %v927
        %v968 = vunpack.c.l.b16 %v928
        %v969 = vunpack.c.l.b16 %v929
        %v970 = vunpack.c.l.b16 %v930
        %v971 = vunpack.c.l.b16 %v931
        %v972 = vpack.c.b16 %v957, %v956
        %v973 = vpack.c.b16 %v959, %v958
        %v974 = vpack.c.b16 %v961, %v960
        %v975 = vpack.c.b16 %v963, %v962
        %v976 = vpack.c.b16 %v965, %v964
        %v977 = vpack.c.b16 %v967, %v966
        %v978 = vpack.c.b16 %v969, %v968
        %v979 = vpack.c.b16 %v971, %v970
        %988 = vmatpush.bf16.msra.mxu0 %v939
        %989 = vmatpush.bf16.msra.mxu0 %v938
        %990 = vmatpush.bf16.msra.mxu0 %v937
        %991 = vmatpush.bf16.msra.mxu0 %v936
        %992 = vmatpush.bf16.msra.mxu0 %v935
        %993 = vmatpush.bf16.msra.mxu0 %v934
        %994 = vmatpush.bf16.msra.mxu0 %v933
        %995 = vmatpush.bf16.msra.mxu0 %v932
        %996 = vmatmul.bf16.gmra.mxu0 %v972
        %v997 = vpop.f32.mrf.mxu0
        %v998 = vadd.f32 0.0, %v997
        %v999 = vpop.f32.mrf.mxu0
        %v1000 = vadd.f32 0.0, %v999
        %1001 = vmatmul.bf16.gmra.mxu0 %v973
        %v1002 = vpop.f32.mrf.mxu0
        %v1003 = vadd.f32 0.0, %v1002
        %v1004 = vpop.f32.mrf.mxu0
        %v1005 = vadd.f32 0.0, %v1004
        %1006 = vmatmul.bf16.gmra.mxu0 %v974
        %v1007 = vpop.f32.mrf.mxu0
        %v1008 = vadd.f32 0.0, %v1007
        %v1009 = vpop.f32.mrf.mxu0
        %v1010 = vadd.f32 0.0, %v1009
        %1011 = vmatmul.bf16.gmra.mxu0 %v975
        %v1012 = vpop.f32.mrf.mxu0
        %v1013 = vadd.f32 0.0, %v1012
        %v1014 = vpop.f32.mrf.mxu0
        %v1015 = vadd.f32 0.0, %v1014
        %1016 = vmatmul.bf16.gmra.mxu0 %v976
        %v1017 = vpop.f32.mrf.mxu0
        %v1018 = vadd.f32 0.0, %v1017
        %v1019 = vpop.f32.mrf.mxu0
        %v1020 = vadd.f32 0.0, %v1019
        %1021 = vmatmul.bf16.gmra.mxu0 %v977
        %v1022 = vpop.f32.mrf.mxu0
        %v1023 = vadd.f32 0.0, %v1022
        %v1024 = vpop.f32.mrf.mxu0
        %v1025 = vadd.f32 0.0, %v1024
        %1026 = vmatmul.bf16.gmra.mxu0 %v978
        %v1027 = vpop.f32.mrf.mxu0
        %v1028 = vadd.f32 0.0, %v1027
        %v1029 = vpop.f32.mrf.mxu0
        %v1030 = vadd.f32 0.0, %v1029
        %1031 = vmatmul.bf16.gmra.mxu0 %v979
        %v1032 = vpop.f32.mrf.mxu0
        %v1033 = vadd.f32 0.0, %v1032
        %v1034 = vpop.f32.mrf.mxu0
        %v1035 = vadd.f32 0.0, %v1034
        %1036 = vdwg.mxu0
        %v1037 = vadd.f32 %v900, %v998
        %v1038 = vadd.f32 %v901, %v1000
        %v1039 = vadd.f32 %v902, %v1003
        %v1040 = vadd.f32 %v903, %v1005
        %v1041 = vadd.f32 %v904, %v1008
        %v1042 = vadd.f32 %v905, %v1010
        %v1043 = vadd.f32 %v906, %v1013
        %v1044 = vadd.f32 %v907, %v1015
        %v1045 = vadd.f32 %v908, %v1018
        %v1046 = vadd.f32 %v909, %v1020
        %v1047 = vadd.f32 %v910, %v1023
        %v1048 = vadd.f32 %v911, %v1025
        %v1049 = vadd.f32 %v912, %v1028
        %v1050 = vadd.f32 %v913, %v1030
        %v1051 = vadd.f32 %v914, %v1033
        %v1052 = vadd.f32 %v915, %v1035
        %1053 = vst [vmem:[#allocation3] sm:$0xff] %v1037
        %1054 = vst [vmem:[#allocation3 + $0x8] sm:$0xff] %v1038
        %1055 = vst [vmem:[#allocation3 + $0x10] sm:$0xff] %v1039
        %1056 = vst [vmem:[#allocation3 + $0x18] sm:$0xff] %v1040
        %1057 = vst [vmem:[#allocation3 + $0x20] sm:$0xff] %v1041
        %1058 = vst [vmem:[#allocation3 + $0x28] sm:$0xff] %v1042
        %1059 = vst [vmem:[#allocation3 + $0x30] sm:$0xff] %v1043
        %1060 = vst [vmem:[#allocation3 + $0x38] sm:$0xff] %v1044
        %1061 = vst [vmem:[#allocation3 + $0x40] sm:$0xff] %v1045
        %1062 = vst [vmem:[#allocation3 + $0x48] sm:$0xff] %v1046
        %1063 = vst [vmem:[#allocation3 + $0x50] sm:$0xff] %v1047
        %1064 = vst [vmem:[#allocation3 + $0x58] sm:$0xff] %v1048
        %1065 = vst [vmem:[#allocation3 + $0x60] sm:$0xff] %v1049
        %1066 = vst [vmem:[#allocation3 + $0x68] sm:$0xff] %v1050
        %1067 = vst [vmem:[#allocation3 + $0x70] sm:$0xff] %v1051
        %1068 = vst [vmem:[#allocation3 + $0x78] sm:$0xff] %v1052
        %p1069 = scmp.eq.s32.totalorder %s30, 1
        // Predicated region
        $region110: #{tpu_custom_call.1} parent=84 // pred_check
          %p1070 = pneg %p1069
        $region111: #{tpu_custom_call.1} parent=84 // pred_check_branch
          %1072 = sbr.rel (%p1070) target = $region113
        $region112: #{tpu_custom_call.1} parent=84 // pred_region
          %s1073 = smul.u32 %s29, 128
          %s1074 = sadd.s32 %s1073, %s881
          %s1075 = scalar_lea.vmem [#allocation2], %s1074
          %v1076 = vld [vmem:[%s1075] sm:$0xff]
          %v1077 = vld [vmem:[%s1075 + $0x8] sm:$0xff]
          %v1078 = vld [vmem:[%s1075 + $0x10] sm:$0xff]
          %v1079 = vld [vmem:[%s1075 + $0x18] sm:$0xff]
          %v1080 = vld [vmem:[%s1075 + $0x20] sm:$0xff]
          %v1081 = vld [vmem:[%s1075 + $0x28] sm:$0xff]
          %v1082 = vld [vmem:[%s1075 + $0x30] sm:$0xff]
          %v1083 = vld [vmem:[%s1075 + $0x38] sm:$0xff]
          %v1084 = vld [vmem:[%s1075 + $0x40] sm:$0xff]
          %v1085 = vld [vmem:[%s1075 + $0x48] sm:$0xff]
          %v1086 = vld [vmem:[%s1075 + $0x50] sm:$0xff]
          %v1087 = vld [vmem:[%s1075 + $0x58] sm:$0xff]
          %v1088 = vld [vmem:[%s1075 + $0x60] sm:$0xff]
          %v1089 = vld [vmem:[%s1075 + $0x68] sm:$0xff]
          %v1090 = vld [vmem:[%s1075 + $0x70] sm:$0xff]
          %v1091 = vld [vmem:[%s1075 + $0x78] sm:$0xff]
          %v1092 = vld [vmem:[#allocation3] sm:$0xff]
          %v1093 = vld [vmem:[#allocation3 + $0x8] sm:$0xff]
          %v1094 = vld [vmem:[#allocation3 + $0x10] sm:$0xff]
          %v1095 = vld [vmem:[#allocation3 + $0x18] sm:$0xff]
          %v1096 = vld [vmem:[#allocation3 + $0x20] sm:$0xff]
          %v1097 = vld [vmem:[#allocation3 + $0x28] sm:$0xff]
          %v1098 = vld [vmem:[#allocation3 + $0x30] sm:$0xff]
          %v1099 = vld [vmem:[#allocation3 + $0x38] sm:$0xff]
          %v1100 = vld [vmem:[#allocation3 + $0x40] sm:$0xff]
          %v1101 = vld [vmem:[#allocation3 + $0x48] sm:$0xff]
          %v1102 = vld [vmem:[#allocation3 + $0x50] sm:$0xff]
          %v1103 = vld [vmem:[#allocation3 + $0x58] sm:$0xff]
          %v1104 = vld [vmem:[#allocation3 + $0x60] sm:$0xff]
          %v1105 = vld [vmem:[#allocation3 + $0x68] sm:$0xff]
          %v1106 = vld [vmem:[#allocation3 + $0x70] sm:$0xff]
          %v1107 = vld [vmem:[#allocation3 + $0x78] sm:$0xff]
          %v1108 = vld [vmem:[%s475] sm:$0xff]
          %v1109 = vld [vmem:[%s475 + $0x8] sm:$0xff]
          %v1110 = vld [vmem:[%s475 + $0x10] sm:$0xff]
          %v1111 = vld [vmem:[%s475 + $0x18] sm:$0xff]
          %v1112 = vld [vmem:[%s475 + $0x20] sm:$0xff]
          %v1113 = vld [vmem:[%s475 + $0x28] sm:$0xff]
          %v1114 = vld [vmem:[%s475 + $0x30] sm:$0xff]
          %v1115 = vld [vmem:[%s475 + $0x38] sm:$0xff]
          %v1116 = vld [vmem:[%s475 + $0x40] sm:$0xff]
          %v1117 = vld [vmem:[%s475 + $0x48] sm:$0xff]
          %v1118 = vld [vmem:[%s475 + $0x50] sm:$0xff]
          %v1119 = vld [vmem:[%s475 + $0x58] sm:$0xff]
          %v1120 = vld [vmem:[%s475 + $0x60] sm:$0xff]
          %v1121 = vld [vmem:[%s475 + $0x68] sm:$0xff]
          %v1122 = vld [vmem:[%s475 + $0x70] sm:$0xff]
          %v1123 = vld [vmem:[%s475 + $0x78] sm:$0xff]
          %1125 = vset.pattern.permute.xlu0 0
          %1126 = vperm.xlu0 %1125, %v1108
          %v1127 = vpop.permute.xlu0 %1126
          %1130 = vset.pattern.permute.xlu0 0
          %1131 = vperm.xlu0 %1130, %v1109
          %v1132 = vpop.permute.xlu0 %1131
          %1135 = vset.pattern.permute.xlu0 0
          %1136 = vperm.xlu0 %1135, %v1110
          %v1137 = vpop.permute.xlu0 %1136
          %1140 = vset.pattern.permute.xlu0 0
          %1141 = vperm.xlu0 %1140, %v1111
          %v1142 = vpop.permute.xlu0 %1141
          %1145 = vset.pattern.permute.xlu0 0
          %1146 = vperm.xlu0 %1145, %v1112
          %v1147 = vpop.permute.xlu0 %1146
          %1150 = vset.pattern.permute.xlu0 0
          %1151 = vperm.xlu0 %1150, %v1113
          %v1152 = vpop.permute.xlu0 %1151
          %1155 = vset.pattern.permute.xlu0 0
          %1156 = vperm.xlu0 %1155, %v1114
          %v1157 = vpop.permute.xlu0 %1156
          %1160 = vset.pattern.permute.xlu0 0
          %1161 = vperm.xlu0 %1160, %v1115
          %v1162 = vpop.permute.xlu0 %1161
          %1165 = vset.pattern.permute.xlu0 0
          %1166 = vperm.xlu0 %1165, %v1116
          %v1167 = vpop.permute.xlu0 %1166
          %1170 = vset.pattern.permute.xlu0 0
          %1171 = vperm.xlu0 %1170, %v1117
          %v1172 = vpop.permute.xlu0 %1171
          %1175 = vset.pattern.permute.xlu0 0
          %1176 = vperm.xlu0 %1175, %v1118
          %v1177 = vpop.permute.xlu0 %1176
          %1180 = vset.pattern.permute.xlu0 0
          %1181 = vperm.xlu0 %1180, %v1119
          %v1182 = vpop.permute.xlu0 %1181
          %1185 = vset.pattern.permute.xlu0 0
          %1186 = vperm.xlu0 %1185, %v1120
          %v1187 = vpop.permute.xlu0 %1186
          %1190 = vset.pattern.permute.xlu0 0
          %1191 = vperm.xlu0 %1190, %v1121
          %v1192 = vpop.permute.xlu0 %1191
          %1195 = vset.pattern.permute.xlu0 0
          %1196 = vperm.xlu0 %1195, %v1122
          %v1197 = vpop.permute.xlu0 %1196
          %1200 = vset.pattern.permute.xlu0 0
          %1201 = vperm.xlu0 %1200, %v1123
          %v1202 = vpop.permute.xlu0 %1201
          %v1204 = vmul.f32 %v1127, %v1076
          %v1205 = vmul.f32 %v1132, %v1077
          %v1206 = vmul.f32 %v1137, %v1078
          %v1207 = vmul.f32 %v1142, %v1079
          %v1208 = vmul.f32 %v1147, %v1080
          %v1209 = vmul.f32 %v1152, %v1081
          %v1210 = vmul.f32 %v1157, %v1082
          %v1211 = vmul.f32 %v1162, %v1083
          %v1212 = vmul.f32 %v1167, %v1084
          %v1213 = vmul.f32 %v1172, %v1085
          %v1214 = vmul.f32 %v1177, %v1086
          %v1215 = vmul.f32 %v1182, %v1087
          %v1216 = vmul.f32 %v1187, %v1088
          %v1217 = vmul.f32 %v1192, %v1089
          %v1218 = vmul.f32 %v1197, %v1090
          %v1219 = vmul.f32 %v1202, %v1091
          %v1220 = vadd.f32 %v1092, %v1204
          %v1221 = vadd.f32 %v1093, %v1205
          %v1222 = vadd.f32 %v1094, %v1206
          %v1223 = vadd.f32 %v1095, %v1207
          %v1224 = vadd.f32 %v1096, %v1208
          %v1225 = vadd.f32 %v1097, %v1209
          %v1226 = vadd.f32 %v1098, %v1210
          %v1227 = vadd.f32 %v1099, %v1211
          %v1228 = vadd.f32 %v1100, %v1212
          %v1229 = vadd.f32 %v1101, %v1213
          %v1230 = vadd.f32 %v1102, %v1214
          %v1231 = vadd.f32 %v1103, %v1215
          %v1232 = vadd.f32 %v1104, %v1216
          %v1233 = vadd.f32 %v1105, %v1217
          %v1234 = vadd.f32 %v1106, %v1218
          %v1235 = vadd.f32 %v1107, %v1219
          %s1236 = smul.u32 %s502, 256
          %s1237 = sadd.s32 %s1073, %s1236
          %s1238 = scalar_lea.vmem [#allocation2], %s1237
          %1239 = vst [vmem:[%s1238] sm:$0xff] %v1220
          %1240 = vst [vmem:[%s1238 + $0x8] sm:$0xff] %v1221
          %1241 = vst [vmem:[%s1238 + $0x10] sm:$0xff] %v1222
          %1242 = vst [vmem:[%s1238 + $0x18] sm:$0xff] %v1223
          %1243 = vst [vmem:[%s1238 + $0x20] sm:$0xff] %v1224
          %1244 = vst [vmem:[%s1238 + $0x28] sm:$0xff] %v1225
          %1245 = vst [vmem:[%s1238 + $0x30] sm:$0xff] %v1226
          %1246 = vst [vmem:[%s1238 + $0x38] sm:$0xff] %v1227
          %1247 = vst [vmem:[%s1238 + $0x40] sm:$0xff] %v1228
          %1248 = vst [vmem:[%s1238 + $0x48] sm:$0xff] %v1229
          %1249 = vst [vmem:[%s1238 + $0x50] sm:$0xff] %v1230
          %1250 = vst [vmem:[%s1238 + $0x58] sm:$0xff] %v1231
          %1251 = vst [vmem:[%s1238 + $0x60] sm:$0xff] %v1232
          %1252 = vst [vmem:[%s1238 + $0x68] sm:$0xff] %v1233
          %1253 = vst [vmem:[%s1238 + $0x70] sm:$0xff] %v1234
          %1254 = vst [vmem:[%s1238 + $0x78] sm:$0xff] %v1235
          %v1255 = vpack.c.bf16 %v1221, %v1220
          %v1256 = vpack.c.bf16 %v1223, %v1222
          %v1257 = vpack.c.bf16 %v1225, %v1224
          %v1258 = vpack.c.bf16 %v1227, %v1226
          %v1259 = vpack.c.bf16 %v1229, %v1228
          %v1260 = vpack.c.bf16 %v1231, %v1230
          %v1261 = vpack.c.bf16 %v1233, %v1232
          %v1262 = vpack.c.bf16 %v1235, %v1234
          %v1263 = vld [vmem:[#allocation9] sm:$0xf]
          %v1264 = vld [vmem:[#allocation9 + $0x4] sm:$0xf]
          %v1265 = vld [vmem:[#allocation9 + $0x8] sm:$0xf]
          %v1266 = vld [vmem:[#allocation9 + $0xc] sm:$0xf]
          %v1267 = vld [vmem:[#allocation9 + $0x10] sm:$0xf]
          %v1268 = vld [vmem:[#allocation9 + $0x14] sm:$0xf]
          %v1269 = vld [vmem:[#allocation9 + $0x18] sm:$0xf]
          %v1270 = vld [vmem:[#allocation9 + $0x1c] sm:$0xf]
          %v1271 = vld [vmem:[#allocation9 + $0x20] sm:$0xf]
          %v1272 = vld [vmem:[#allocation9 + $0x24] sm:$0xf]
          %v1273 = vld [vmem:[#allocation9 + $0x28] sm:$0xf]
          %v1274 = vld [vmem:[#allocation9 + $0x2c] sm:$0xf]
          %v1275 = vld [vmem:[#allocation9 + $0x30] sm:$0xf]
          %v1276 = vld [vmem:[#allocation9 + $0x34] sm:$0xf]
          %v1277 = vld [vmem:[#allocation9 + $0x38] sm:$0xf]
          %v1278 = vld [vmem:[#allocation9 + $0x3c] sm:$0xf]
          %v1279 = vld [vmem:[%s4] sm:$0x1]
          %v1281 = vperm.slane %v1279, 0
          %v1299 = vunpack.c.l.b16 %v1263
          %v1300 = vunpack.c.l.b16 %v1264
          %v1301 = vunpack.c.l.b16 %v1265
          %v1302 = vunpack.c.l.b16 %v1266
          %v1303 = vunpack.c.l.b16 %v1267
          %v1304 = vunpack.c.l.b16 %v1268
          %v1305 = vunpack.c.l.b16 %v1269
          %v1306 = vunpack.c.l.b16 %v1270
          %v1307 = vunpack.c.l.b16 %v1271
          %v1308 = vunpack.c.l.b16 %v1272
          %v1309 = vunpack.c.l.b16 %v1273
          %v1310 = vunpack.c.l.b16 %v1274
          %v1311 = vunpack.c.l.b16 %v1275
          %v1312 = vunpack.c.l.b16 %v1276
          %v1313 = vunpack.c.l.b16 %v1277
          %v1314 = vunpack.c.l.b16 %v1278
          %v1315 = vpack.c.b16 %v1300, %v1299
          %v1316 = vpack.c.b16 %v1302, %v1301
          %v1317 = vpack.c.b16 %v1304, %v1303
          %v1318 = vpack.c.b16 %v1306, %v1305
          %v1319 = vpack.c.b16 %v1308, %v1307
          %v1320 = vpack.c.b16 %v1310, %v1309
          %v1321 = vpack.c.b16 %v1312, %v1311
          %v1322 = vpack.c.b16 %v1314, %v1313
          %1331 = vmatpush.bf16.msra.mxu0 %v1322
          %1332 = vmatpush.bf16.msra.mxu0 %v1321
          %1333 = vmatpush.bf16.msra.mxu0 %v1320
          %1334 = vmatpush.bf16.msra.mxu0 %v1319
          %1335 = vmatpush.bf16.msra.mxu0 %v1318
          %1336 = vmatpush.bf16.msra.mxu0 %v1317
          %1337 = vmatpush.bf16.msra.mxu0 %v1316
          %1338 = vmatpush.bf16.msra.mxu0 %v1315
          %1339 = vmatmul.bf16.gmra.mxu0 %v1255
          %v1340 = vpop.f32.mrf.mxu0
          %v1341 = vadd.f32 %v1281, %v1340
          %v1342 = vpop.f32.mrf.mxu0
          %v1343 = vadd.f32 %v1281, %v1342
          %1344 = vmatmul.bf16.gmra.mxu0 %v1256
          %v1345 = vpop.f32.mrf.mxu0
          %v1346 = vadd.f32 %v1281, %v1345
          %v1347 = vpop.f32.mrf.mxu0
          %v1348 = vadd.f32 %v1281, %v1347
          %1349 = vmatmul.bf16.gmra.mxu0 %v1257
          %v1350 = vpop.f32.mrf.mxu0
          %v1351 = vadd.f32 %v1281, %v1350
          %v1352 = vpop.f32.mrf.mxu0
          %v1353 = vadd.f32 %v1281, %v1352
          %1354 = vmatmul.bf16.gmra.mxu0 %v1258
          %v1355 = vpop.f32.mrf.mxu0
          %v1356 = vadd.f32 %v1281, %v1355
          %v1357 = vpop.f32.mrf.mxu0
          %v1358 = vadd.f32 %v1281, %v1357
          %1359 = vmatmul.bf16.gmra.mxu0 %v1259
          %v1360 = vpop.f32.mrf.mxu0
          %v1361 = vadd.f32 %v1281, %v1360
          %v1362 = vpop.f32.mrf.mxu0
          %v1363 = vadd.f32 %v1281, %v1362
          %1364 = vmatmul.bf16.gmra.mxu0 %v1260
          %v1365 = vpop.f32.mrf.mxu0
          %v1366 = vadd.f32 %v1281, %v1365
          %v1367 = vpop.f32.mrf.mxu0
          %v1368 = vadd.f32 %v1281, %v1367
          %1369 = vmatmul.bf16.gmra.mxu0 %v1261
          %v1370 = vpop.f32.mrf.mxu0
          %v1371 = vadd.f32 %v1281, %v1370
          %v1372 = vpop.f32.mrf.mxu0
          %v1373 = vadd.f32 %v1281, %v1372
          %1374 = vmatmul.bf16.gmra.mxu0 %v1262
          %v1375 = vpop.f32.mrf.mxu0
          %v1376 = vadd.f32 %v1281, %v1375
          %v1377 = vpop.f32.mrf.mxu0
          %v1378 = vadd.f32 %v1281, %v1377
          %1379 = vdwg.mxu0
          %1380 = vst [vmem:[%s469] sm:$0xff] %v1341
          %1381 = vst [vmem:[%s469 + $0x8] sm:$0xff] %v1343
          %1382 = vst [vmem:[%s469 + $0x10] sm:$0xff] %v1346
          %1383 = vst [vmem:[%s469 + $0x18] sm:$0xff] %v1348
          %1384 = vst [vmem:[%s469 + $0x20] sm:$0xff] %v1351
          %1385 = vst [vmem:[%s469 + $0x28] sm:$0xff] %v1353
          %1386 = vst [vmem:[%s469 + $0x30] sm:$0xff] %v1356
          %1387 = vst [vmem:[%s469 + $0x38] sm:$0xff] %v1358
          %1388 = vst [vmem:[%s469 + $0x40] sm:$0xff] %v1361
          %1389 = vst [vmem:[%s469 + $0x48] sm:$0xff] %v1363
          %1390 = vst [vmem:[%s469 + $0x50] sm:$0xff] %v1366
          %1391 = vst [vmem:[%s469 + $0x58] sm:$0xff] %v1368
          %1392 = vst [vmem:[%s469 + $0x60] sm:$0xff] %v1371
          %1393 = vst [vmem:[%s469 + $0x68] sm:$0xff] %v1373
          %1394 = vst [vmem:[%s469 + $0x70] sm:$0xff] %v1376
          %1395 = vst [vmem:[%s469 + $0x78] sm:$0xff] %v1378
        $region113: #{tpu_custom_call.1} parent=84 // pred_fallthru
          _
        %s1396 = sand.u32 %s209, 1
        %s1397 = scalar_lea.sflag [#allocation6], %s1396
        %s1398 = sand.u32 %s209, 1
        %s1399 = smul.addr %s1398, 128
        %s1400 = scalar_lea.vmem [#allocation11], %s1399
        // Predicated region
        $region114: #{tpu_custom_call.1} parent=84 // pred_check
          %p1401 = pneg %p219
        $region115: #{tpu_custom_call.1} parent=84 // pred_check_branch
          %1403 = sbr.rel (%p1401) target = $region117
        $region116: #{tpu_custom_call.1} parent=84 // pred_region
          %s1404 = smul.u32 16, %s29
          %1406 = vsyncadd %s1397, 0
          %s1407 = smul.addr %s1404, 8
          %s1408 = scalar_lea.hbm %s7, %s1407
          %s1409 = sshll.u32 %s1400, 4
          %s1410 = int_to_ptr.vmem [resolvable:$true] %s1409
          %s1411 = sshll.u32 %s1408, 4
          %s1412 = int_to_ptr.hbm [resolvable:$true] %s1411
          %1417 = dma.vmem_to_hbm [thread:$0]  %s1410, 2048, %s1412, %s1397, 128, 128, 8
        $region117: #{tpu_custom_call.1} parent=84 // pred_fallthru
          _
      $region85: #{tpu_custom_call.1} parent=5 // pred_fallthru
        _
      %p1418 = scmp.le.s32.totalorder 2, %s18
      // Predicated region
      $region118: #{tpu_custom_call.1} parent=5 // pred_check
        %p1419 = pneg %p1418
      $region119: #{tpu_custom_call.1} parent=5 // pred_check_branch
        %1421 = sbr.rel (%p1419) target = $region121
      $region120: #{tpu_custom_call.1} parent=5 // pred_region
        %s1422 = ssub.s32 %s18, 2
        // Predicated region
        $region122: #{tpu_custom_call.1} parent=120 // pred_check
          %p1423 = pneg %p225
        $region123: #{tpu_custom_call.1} parent=120 // pred_check_branch
          %1425 = sbr.rel (%p1423) target = $region125
        $region124: #{tpu_custom_call.1} parent=120 // pred_region
          %s1426 = sand.u32 %s210, 1
          %s1427 = scalar_lea.sflag [#allocation6], %s1426
          %s1428 = sand.u32 %s210, 1
          %s1429 = smul.addr %s1428, 128
          %s1430 = scalar_lea.vmem [#allocation11], %s1429
          %1432 = dma.done %s1427, 2048
        $region125: #{tpu_custom_call.1} parent=120 // pred_fallthru
          _
      $region121: #{tpu_custom_call.1} parent=5 // pred_fallthru
        _
    $region6: #{tpu_custom_call.1} parent=1 // loop_footer
      %s22 = sadd.s32 1, %s18
    $region7: #{tpu_custom_call.1} parent=1 // loop_footer_branch
      %17 = sbr.rel target = $region3
    $region8: #{tpu_custom_call.1} parent=1 // loop_exit
      _
    %1433 = vsyncpa [#allocation5], 1
    %s1434 = scalar_lea.sflag [#allocation5], 1
    %1435 = vsyncpa %s1434, 1
    %1436 = vsyncpa [#allocation8], 1
    %1437 = vsyncpa [#allocation6], 1
    %s1438 = scalar_lea.sflag [#allocation6], 1
    %1439 = vsyncpa %s1438, 1

</llo_original>
